<compile_context>
chip_gen: v7x
topology: tpu7x:2x2x1
jax: 0.10.0
libtpu: 0.0.40
codegen_flags: <defaults>
</compile_context>

<pallas_src>
import jax
import jax.numpy as jnp
from jax.experimental import pallas as pl
from jax.experimental.pallas import tpu as pltpu


IN_FEATURES = 3072
HID1 = 512
HID2 = 256
NUM_CLASSES = 10
PAD_BATCH = 8          # pad batch up to sublane multiple for clean VMEM tiling
TK = 512               # K-tile for fc1
K_TILES = IN_FEATURES // TK


def lenet_kernel(x_ref, w1_ref, b1_ref,
                 w2_ref, b2_ref,
                 w3_ref, b3_ref,
                 m1_ref, m2_ref,
                 o_ref,
                 h1_acc):
    k = pl.program_id(0)

    # Zero the fc1 accumulator on the first K-tile.
    @pl.when(k == 0)
    def _():
        h1_acc[...] = jnp.zeros_like(h1_acc)

    # fc1 partial product: (B, TK) @ (TK, 512), bf16 in / f32 accumulate.
    h1_acc[...] += jnp.dot(x_ref[...], w1_ref[...],
                           preferred_element_type=jnp.float32)

    # Epilogue on the last K-tile: bias/ReLU/dropout, fc2, fc3, softmax.
    @pl.when(k == pl.num_programs(0) - 1)
    def _():
        h1 = jnp.maximum(h1_acc[...] + b1_ref[...], 0.0)          # (B, 512) f32
        h1 = h1 * m1_ref[...]                                     # dropout scale 0/2

        h2 = jnp.dot(h1.astype(jnp.bfloat16), w2_ref[...],
                     preferred_element_type=jnp.float32)
        h2 = jnp.maximum(h2 + b2_ref[...], 0.0)                   # (B, 256) f32
        h2 = h2 * m2_ref[...]

        logits = jnp.dot(h2.astype(jnp.bfloat16), w3_ref[...],
                         preferred_element_type=jnp.float32)
        logits = logits + b3_ref[...]                             # (B, 10) f32

        m = jnp.max(logits, axis=1, keepdims=True)
        e = jnp.exp(logits - m)
        o_ref[...] = e / jnp.sum(e, axis=1, keepdims=True)


@jax.jit
def lenet_forward(x, params, seed):
    """x: (B, 3, 32, 32) float32.  Returns (B, 10) softmax probabilities."""
    w1, b1, w2, b2, w3, b3 = params
    B = x.shape[0]
    xf = x.reshape(B, IN_FEATURES)                 # PyTorch view(-1, 3072)

    # Pad batch to a sublane multiple; padded rows are discarded afterwards.
    xp = jnp.zeros((PAD_BATCH, IN_FEATURES), jnp.float32).at[:B].set(xf)
    xp = xp.astype(jnp.bfloat16)

    # Inverted-dropout scale masks (train mode, p=0.5): each element is 0 or 2.
    key = jax.random.PRNGKey(seed)
    k1, k2 = jax.random.split(key)
    m1 = jax.random.bernoulli(k1, 0.5, (PAD_BATCH, HID1)).astype(jnp.float32) * 2.0
    m2 = jax.random.bernoulli(k2, 0.5, (PAD_BATCH, HID2)).astype(jnp.float32) * 2.0

    out = pl.pallas_call(
        lenet_kernel,
        out_shape=jax.ShapeDtypeStruct((PAD_BATCH, NUM_CLASSES), jnp.float32),
        grid_spec=pltpu.PrefetchScalarGridSpec(
            num_scalar_prefetch=0,
            grid=(K_TILES,),
            in_specs=[
                pl.BlockSpec((PAD_BATCH, TK),         lambda k: (0, k)),  # x chunk
                pl.BlockSpec((TK, HID1),              lambda k: (k, 0)),  # w1 chunk
                pl.BlockSpec((1, HID1),               lambda k: (0, 0)),  # b1
                pl.BlockSpec((HID1, HID2),            lambda k: (0, 0)),  # w2
                pl.BlockSpec((1, HID2),               lambda k: (0, 0)),  # b2
                pl.BlockSpec((HID2, NUM_CLASSES),     lambda k: (0, 0)),  # w3
                pl.BlockSpec((1, NUM_CLASSES),        lambda k: (0, 0)),  # b3
                pl.BlockSpec((PAD_BATCH, HID1),       lambda k: (0, 0)),  # dropout mask 1
                pl.BlockSpec((PAD_BATCH, HID2),       lambda k: (0, 0)),  # dropout mask 2
            ],
            out_specs=pl.BlockSpec((PAD_BATCH, NUM_CLASSES), lambda k: (0, 0)),
            scratch_shapes=[pltpu.VMEM((PAD_BATCH, HID1), jnp.float32)],
        ),
        compiler_params=pltpu.CompilerParams(
            dimension_semantics=("arbitrary",),      # K axis is a reduction
            vmem_limit_bytes=32 << 20,
        ),
    )(xp, w1, b1, w2, b2, w3, b3, m1, m2)

    return out[:B]


def init_params(key):
    """Deterministic init mimicking PyTorch Linear default U(-1/sqrt(in), 1/sqrt(in)).
    Weights stored as (in_features, out_features) bf16; biases stay f32."""
    ks = jax.random.split(key, 6)

    def linear(kw, kb, fin, fout):
        bound = 1.0 / jnp.sqrt(jnp.float32(fin))
        w = jax.random.uniform(kw, (fin, fout), jnp.float32, -bound, bound)
        b = jax.random.uniform(kb, (1, fout), jnp.float32, -bound, bound)
        return w.astype(jnp.bfloat16), b

    w1, b1 = linear(ks[0], ks[1], IN_FEATURES, HID1)
    w2, b2 = linear(ks[2], ks[3], HID1, HID2)
    w3, b3 = linear(ks[4], ks[5], HID2, NUM_CLASSES)
    return (w1, b1, w2, b2, w3, b3)


if __name__ == "__main__":
    key = jax.random.PRNGKey(0)
    k_param, k_x = jax.random.split(key)

    params = init_params(k_param)

    # Small batch, CIFAR10-shaped input (B, 3, 32, 32) -> 3072 features.
    B = 2
    x = jax.random.normal(k_x, (B, 3, 32, 32), dtype=jnp.float32)

    probs = lenet_forward(x, params, seed=0)
    probs = jax.block_until_ready(probs)

    assert probs.shape == (B, NUM_CLASSES)
    # Softmax rows should sum to ~1.
    assert jnp.allclose(jnp.sum(probs, axis=1), 1.0, atol=1e-3)

    print("KERNEL_OK")
</pallas_src>

<mosaic_0001>
module attributes {stable_mosaic.version = 11 : i64} {
  func.func @lenet_kernel(%arg0: i32, %arg1: memref<8x512xbf16, #tpu.memory_space<vmem>>, %arg2: memref<512x512xbf16, #tpu.memory_space<vmem>>, %arg3: memref<1x512xf32, #tpu.memory_space<vmem>>, %arg4: memref<512x256xbf16, #tpu.memory_space<vmem>>, %arg5: memref<1x256xf32, #tpu.memory_space<vmem>>, %arg6: memref<256x10xbf16, #tpu.memory_space<vmem>>, %arg7: memref<1x10xf32, #tpu.memory_space<vmem>>, %arg8: memref<8x512xf32, #tpu.memory_space<vmem>>, %arg9: memref<8x256xf32, #tpu.memory_space<vmem>>, %arg10: memref<8x10xf32, #tpu.memory_space<vmem>>, %arg11: memref<8x512xf32, #tpu.memory_space<vmem>>) attributes {dimension_semantics = [#tpu.dimension_semantics<arbitrary>], iteration_bounds = array<i64: 6>, scalar_prefetch = 0 : i64, scratch_operands = 1 : i64, tpu.core_type = #tpu.core_type<tc>, window_params = [{transform_indices = @transform_0, window_bounds = array<i64: 8, 512>}, {transform_indices = @transform_1, window_bounds = array<i64: 512, 512>}, {pipeline_mode = #tpu.pipeline_mode<synchronous>, transform_indices = @transform_2, window_bounds = array<i64: 1, 512>}, {pipeline_mode = #tpu.pipeline_mode<synchronous>, transform_indices = @transform_3, window_bounds = array<i64: 512, 256>}, {pipeline_mode = #tpu.pipeline_mode<synchronous>, transform_indices = @transform_4, window_bounds = array<i64: 1, 256>}, {pipeline_mode = #tpu.pipeline_mode<synchronous>, transform_indices = @transform_5, window_bounds = array<i64: 256, 10>}, {pipeline_mode = #tpu.pipeline_mode<synchronous>, transform_indices = @transform_6, window_bounds = array<i64: 1, 10>}, {pipeline_mode = #tpu.pipeline_mode<synchronous>, transform_indices = @transform_7, window_bounds = array<i64: 8, 512>}, {pipeline_mode = #tpu.pipeline_mode<synchronous>, transform_indices = @transform_8, window_bounds = array<i64: 8, 256>}, {pipeline_mode = #tpu.pipeline_mode<synchronous>, transform_indices = @transform_9, window_bounds = array<i64: 8, 10>}]} {
    %c0_i32 = arith.constant 0 : i32
    %0 = arith.cmpi eq, %arg0, %c0_i32 : i32
    %1 = arith.extui %0 : i1 to i32
    %c0_i32_0 = arith.constant 0 : i32
    %2 = arith.cmpi ne, %1, %c0_i32_0 : i32
    scf.if %2 {
      %cst_9 = arith.constant 0.000000e+00 : f32
      %12 = vector.broadcast %cst_9 : f32 to vector<8x512xf32>
      %c0_10 = arith.constant 0 : index
      %c0_11 = arith.constant 0 : index
      %13 = vector.load %arg11[%c0_10, %c0_11] : memref<8x512xf32, #tpu.memory_space<vmem>>, vector<8x512xf32>
      tpu.vector_store %arg11[%c0_10, %c0_11], %12 {strides = array<i32>} : memref<8x512xf32, #tpu.memory_space<vmem>>, vector<8x512xf32>,
    } else {
    }
    %c0 = arith.constant 0 : index
    %c0_1 = arith.constant 0 : index
    %3 = vector.load %arg11[%c0, %c0_1] : memref<8x512xf32, #tpu.memory_space<vmem>>, vector<8x512xf32>
    %c0_2 = arith.constant 0 : index
    %c0_3 = arith.constant 0 : index
    %4 = vector.load %arg1[%c0_2, %c0_3] : memref<8x512xbf16, #tpu.memory_space<vmem>>, vector<8x512xbf16>
    %c0_4 = arith.constant 0 : index
    %c0_5 = arith.constant 0 : index
    %5 = vector.load %arg2[%c0_4, %c0_5] : memref<512x512xbf16, #tpu.memory_space<vmem>>, vector<512x512xbf16>
    %cst = arith.constant dense<0.000000e+00> : vector<8x512xf32>
    %6 = tpu.matmul %4, %5, %cst {dimension_numbers = #tpu.dot_dimension_numbers<[1], [0], [0], [1], [0, 0, 1, 1], [], []>} : vector<8x512xbf16>, vector<512x512xbf16>, vector<8x512xf32> -> vector<8x512xf32>
    %7 = arith.addf %3, %6 : vector<8x512xf32>
    %c0_6 = arith.constant 0 : index
    %c0_7 = arith.constant 0 : index
    %8 = vector.load %arg11[%c0_6, %c0_7] : memref<8x512xf32, #tpu.memory_space<vmem>>, vector<8x512xf32>
    tpu.vector_store %arg11[%c0_6, %c0_7], %7 {strides = array<i32>} : memref<8x512xf32, #tpu.memory_space<vmem>>, vector<8x512xf32>,
    %c5_i32 = arith.constant 5 : i32
    %9 = arith.cmpi eq, %arg0, %c5_i32 : i32
    %10 = arith.extui %9 : i1 to i32
    %c0_i32_8 = arith.constant 0 : i32
    %11 = arith.cmpi ne, %10, %c0_i32_8 : i32
    scf.if %11 {
      %c0_9 = arith.constant 0 : index
      %c0_10 = arith.constant 0 : index
      %12 = vector.load %arg11[%c0_9, %c0_10] : memref<8x512xf32, #tpu.memory_space<vmem>>, vector<8x512xf32>
      %c0_11 = arith.constant 0 : index
      %c0_12 = arith.constant 0 : index
      %13 = vector.load %arg3[%c0_11, %c0_12] : memref<1x512xf32, #tpu.memory_space<vmem>>, vector<1x512xf32>
      %14 = vector.broadcast %13 : vector<1x512xf32> to vector<8x512xf32>
      %15 = arith.addf %12, %14 : vector<8x512xf32>
      %cst_13 = arith.constant 0.000000e+00 : f32
      %16 = vector.broadcast %cst_13 : f32 to vector<8x512xf32>
      %17 = arith.maximumf %15, %16 : vector<8x512xf32>
      %c0_14 = arith.constant 0 : index
      %c0_15 = arith.constant 0 : index
      %18 = vector.load %arg8[%c0_14, %c0_15] : memref<8x512xf32, #tpu.memory_space<vmem>>, vector<8x512xf32>
      %19 = arith.mulf %17, %18 : vector<8x512xf32>
      %20 = arith.truncf %19 : vector<8x512xf32> to vector<8x512xbf16>
      %c0_16 = arith.constant 0 : index
      %c0_17 = arith.constant 0 : index
      %21 = vector.load %arg4[%c0_16, %c0_17] : memref<512x256xbf16, #tpu.memory_space<vmem>>, vector<512x256xbf16>
      %cst_18 = arith.constant dense<0.000000e+00> : vector<8x256xf32>
      %22 = tpu.matmul %20, %21, %cst_18 {dimension_numbers = #tpu.dot_dimension_numbers<[1], [0], [0], [1], [0, 0, 1, 1], [], []>} : vector<8x512xbf16>, vector<512x256xbf16>, vector<8x256xf32> -> vector<8x256xf32>
      %c0_19 = arith.constant 0 : index
      %c0_20 = arith.constant 0 : index
      %23 = vector.load %arg5[%c0_19, %c0_20] : memref<1x256xf32, #tpu.memory_space<vmem>>, vector<1x256xf32>
      %24 = vector.broadcast %23 : vector<1x256xf32> to vector<8x256xf32>
      %25 = arith.addf %22, %24 : vector<8x256xf32>
      %cst_21 = arith.constant 0.000000e+00 : f32
      %26 = vector.broadcast %cst_21 : f32 to vector<8x256xf32>
      %27 = arith.maximumf %25, %26 : vector<8x256xf32>
      %c0_22 = arith.constant 0 : index
      %c0_23 = arith.constant 0 : index
      %28 = vector.load %arg9[%c0_22, %c0_23] : memref<8x256xf32, #tpu.memory_space<vmem>>, vector<8x256xf32>
      %29 = arith.mulf %27, %28 : vector<8x256xf32>
      %30 = arith.truncf %29 : vector<8x256xf32> to vector<8x256xbf16>
      %c0_24 = arith.constant 0 : index
      %c0_25 = arith.constant 0 : index
      %31 = vector.load %arg6[%c0_24, %c0_25] : memref<256x10xbf16, #tpu.memory_space<vmem>>, vector<256x10xbf16>
      %cst_26 = arith.constant dense<0.000000e+00> : vector<8x10xf32>
      %32 = tpu.matmul %30, %31, %cst_26 {dimension_numbers = #tpu.dot_dimension_numbers<[1], [0], [0], [1], [0, 0, 1, 1], [], []>} : vector<8x256xbf16>, vector<256x10xbf16>, vector<8x10xf32> -> vector<8x10xf32>
      %c0_27 = arith.constant 0 : index
      %c0_28 = arith.constant 0 : index
      %33 = vector.load %arg7[%c0_27, %c0_28] : memref<1x10xf32, #tpu.memory_space<vmem>>, vector<1x10xf32>
      %34 = vector.broadcast %33 : vector<1x10xf32> to vector<8x10xf32>
      %35 = arith.addf %32, %34 : vector<8x10xf32>
      %cst_29 = arith.constant dense<0xFF800000> : vector<8xf32>
      %36 = vector.multi_reduction <maximumf>, %35, %cst_29 [1] : vector<8x10xf32> to vector<8xf32>
      %37 = vector.shape_cast %36 : vector<8xf32> to vector<8x1xf32>
      %38 = vector.broadcast %37 : vector<8x1xf32> to vector<8x10xf32>
      %39 = arith.subf %35, %38 : vector<8x10xf32>
      %40 = math.exp %39 : vector<8x10xf32>
      %cst_30 = arith.constant dense<0.000000e+00> : vector<8xf32>
      %41 = vector.multi_reduction <add>, %40, %cst_30 [1] : vector<8x10xf32> to vector<8xf32>
      %42 = vector.shape_cast %41 : vector<8xf32> to vector<8x1xf32>
      %43 = vector.broadcast %42 : vector<8x1xf32> to vector<8x10xf32>
      %44 = arith.divf %40, %43 : vector<8x10xf32>
      %c0_31 = arith.constant 0 : index
      %c0_32 = arith.constant 0 : index
      %45 = vector.load %arg10[%c0_31, %c0_32] : memref<8x10xf32, #tpu.memory_space<vmem>>, vector<8x10xf32>
      tpu.vector_store %arg10[%c0_31, %c0_32], %44 {strides = array<i32>} : memref<8x10xf32, #tpu.memory_space<vmem>>, vector<8x10xf32>,
    } else {
    }
    return
  }
  func.func @transform_0(%arg0: i32) -> (i32, i32) {
    %c0_i32 = arith.constant 0 : i32
    %c0_i32_0 = arith.constant 0 : i32
    return %c0_i32, %arg0 : i32, i32
  }
  func.func @transform_1(%arg0: i32) -> (i32, i32) {
    %c0_i32 = arith.constant 0 : i32
    %c0_i32_0 = arith.constant 0 : i32
    return %arg0, %c0_i32 : i32, i32
  }
  func.func @transform_2(%arg0: i32) -> (i32, i32) {
    %c0_i32 = arith.constant 0 : i32
    %c0_i32_0 = arith.constant 0 : i32
    %c0_i32_1 = arith.constant 0 : i32
    return %c0_i32, %c0_i32_0 : i32, i32
  }
  func.func @transform_3(%arg0: i32) -> (i32, i32) {
    %c0_i32 = arith.constant 0 : i32
    %c0_i32_0 = arith.constant 0 : i32
    %c0_i32_1 = arith.constant 0 : i32
    return %c0_i32, %c0_i32_0 : i32, i32
  }
  func.func @transform_4(%arg0: i32) -> (i32, i32) {
    %c0_i32 = arith.constant 0 : i32
    %c0_i32_0 = arith.constant 0 : i32
    %c0_i32_1 = arith.constant 0 : i32
    return %c0_i32, %c0_i32_0 : i32, i32
  }
  func.func @transform_5(%arg0: i32) -> (i32, i32) {
    %c0_i32 = arith.constant 0 : i32
    %c0_i32_0 = arith.constant 0 : i32
    %c0_i32_1 = arith.constant 0 : i32
    return %c0_i32, %c0_i32_0 : i32, i32
  }
  func.func @transform_6(%arg0: i32) -> (i32, i32) {
    %c0_i32 = arith.constant 0 : i32
    %c0_i32_0 = arith.constant 0 : i32
    %c0_i32_1 = arith.constant 0 : i32
    return %c0_i32, %c0_i32_0 : i32, i32
  }
  func.func @transform_7(%arg0: i32) -> (i32, i32) {
    %c0_i32 = arith.constant 0 : i32
    %c0_i32_0 = arith.constant 0 : i32
    %c0_i32_1 = arith.constant 0 : i32
    return %c0_i32, %c0_i32_0 : i32, i32
  }
  func.func @transform_8(%arg0: i32) -> (i32, i32) {
    %c0_i32 = arith.constant 0 : i32
    %c0_i32_0 = arith.constant 0 : i32
    %c0_i32_1 = arith.constant 0 : i32
    return %c0_i32, %c0_i32_0 : i32, i32
  }
  func.func @transform_9(%arg0: i32) -> (i32, i32) {
    %c0_i32 = arith.constant 0 : i32
    %c0_i32_0 = arith.constant 0 : i32
    %c0_i32_1 = arith.constant 0 : i32
    return %c0_i32, %c0_i32_0 : i32, i32
  }
}

</mosaic_0001>

<llo_original>
// kernel: lenet_forward.3
$region0: #{lenet_forward.3}
  #allocation0 [shape = 'u32[]', space=smem, size = 0x4, offset = 0x4, fixed_abs, tag = 'smem constant byte address 0x4 - core index']
  #allocation1 [shape = 'u32[144,128]{1,0:T(1,128)}', space=vmem, size = 0x12000, scoped, tag = 'internal scratch']
  #allocation2 [shape = 'f32[8,512]{1,0:T(8,128)}', space=vmem, size = 0x4000, scoped, tag = 'scratch operand']
  %s0 = inlined_call_operand.vmem [shape: bf16[8,3072], index: 0, kind: input, shape index: {}]
  %s1 = inlined_call_operand.hbm [shape: bf16[3072,512], index: 1, kind: input, shape index: {}]
  %s2 = inlined_call_operand.hbm [shape: f32[1,512], index: 2, kind: input, shape index: {}]
  %s3 = inlined_call_operand.hbm [shape: bf16[512,256], index: 3, kind: input, shape index: {}]
  %s4 = inlined_call_operand.hbm [shape: f32[1,256], index: 4, kind: input, shape index: {}]
  %s5 = inlined_call_operand.vmem [shape: bf16[256,10], index: 5, kind: input, shape index: {}]
  %s6 = inlined_call_operand.hbm [shape: f32[1,10], index: 6, kind: input, shape index: {}]
  %s7 = inlined_call_operand.vmem [shape: f32[8,512], index: 7, kind: input, shape index: {}]
  %s8 = inlined_call_operand.vmem [shape: f32[8,256], index: 8, kind: input, shape index: {}]
  %s9 = inlined_call_operand.vmem [shape: f32[8,10], index: 9, kind: output, shape index: {}]
  %s10 = sld [smem:[#allocation0]]
  $region97: #{lenet_forward.3} parent=0
    _
  %s12 = ssub.s32 1, %s10
  %s13 = scalar_select 0, %s12, %s10
  $region1: #{lenet_forward.3} parent=0
    #allocation3 [shape = 'u8[1048576]{0}', space=vmem, size = 0x100000, scoped, tag = 'input window, operand 1']
    #allocation4 [shape = 's32[2]{0}', space=sflag, size = 0x8, scoped, tag = 'scoped memory for lenet_forward.3']
    #allocation5 [shape = 'u8[2048]{0}', space=vmem, size = 0x800, scoped, tag = 'input window, operand 2, single buffered']
    #allocation6 [shape = 's32[1]{0}', space=sflag, size = 0x4, scoped, tag = 'scoped memory for lenet_forward.3']
    #allocation7 [shape = 'u8[262144]{0}', space=vmem, size = 0x40000, scoped, tag = 'input window, operand 3, single buffered']
    #allocation8 [shape = 'u8[1024]{0}', space=vmem, size = 0x400, scoped, tag = 'input window, operand 4, single buffered']
    #allocation9 [shape = 's32[1]{0}', space=sflag, size = 0x4, scoped, tag = 'scoped memory for lenet_forward.3']
    #allocation10 [shape = 'u8[512]{0}', space=vmem, size = 0x400, scoped, tag = 'input window, operand 6, single buffered']
    %14 = vsyncpa [#allocation4], 0
    %s15 = scalar_lea.sflag [#allocation4], 1
    %16 = vsyncpa %s15, 0
    %17 = vsyncpa [#allocation6], 0
    %18 = vsyncpa [#allocation9], 0
    loop: start=0, step=1, limit=8
    $region2: #{lenet_forward.3} parent=1 // loop_pre_header
      _
    $region3: #{lenet_forward.3} parent=1 // loop_header
      %s20 = sphi 0, %s24
      %p21 = scmp.ge.s32.totalorder %s20, 8
      %s30 = sphi 0, %s32
      %s33 = sphi 0, %s30
      %s34 = sphi 0, %s33
      %s50 = sphi 0, %s34
      %s56 = sphi 0, %s58
      %s59 = sphi 0, %s56
      %s60 = sphi 0, %s59
      %s76 = sphi 0, %s60
      %s80 = sphi 0, %s80
      %s82 = sphi 0, %s80
      %s83 = sphi 0, %s82
      %s97 = sphi 0, %s83
      %s101 = sphi 0, %s101
      %s103 = sphi 0, %s101
      %s104 = sphi 0, %s103
      %s118 = sphi 0, %s104
      %s122 = sphi 0, %s122
      %s124 = sphi 0, %s122
      %s125 = sphi 0, %s124
      %s139 = sphi 0, %s125
      %s143 = sphi 0, %s143
      %s145 = sphi 0, %s143
      %s146 = sphi 0, %s145
      %s160 = sphi 0, %s146
      %s164 = sphi 0, %s164
      %s166 = sphi 0, %s164
      %s167 = sphi 0, %s166
      %s181 = sphi 0, %s167
      %s185 = sphi 0, %s185
      %s187 = sphi 0, %s185
      %s188 = sphi 0, %s187
      %s202 = sphi 0, %s188
      %s206 = sphi 0, %s206
      %s208 = sphi 0, %s206
      %s209 = sphi 0, %s208
      %s223 = sphi 0, %s209
      %s227 = sphi 0, %s227
      %s229 = sphi 0, %s227
      %s230 = sphi 0, %s229
      %s244 = sphi 0, %s230
    $region4: #{lenet_forward.3} parent=1 // loop_header_branch
      %23 = sbr.rel (%p21) target = $region8
    $region5: #{lenet_forward.3} parent=1 // loop_body
      %s25 = ssub.s32 %s20, 1
      %s26 = ssub.s32 %s20, 2
      %s27 = sadd.s32 %s20, 1
      %s28 = ssub.s32 %s20, %s27
      %p29 = scmp.eq.s32.totalorder %s28, 0
      %s31 = sadd.s32 %s30, 1
      %s32 = scalar_select %p29, %s30, %s31
      %p35 = pneg %p29
      %p36 = scmp.eq.s32.totalorder %s20, 5
      %p37 = por %p35, %p36
      %p38 = scmp.ne.s32.totalorder %s30, %s33
      %p39 = scmp.eq.s32.totalorder %s20, 0
      %p40 = por %p38, %p39
      %p41 = scmp.ne.s32.totalorder %s30, %s33
      %p42 = scmp.eq.s32.totalorder %s25, 5
      %p43 = por %p41, %p42
      %p44 = scmp.ne.s32.totalorder %s33, %s34
      %p45 = scmp.eq.s32.totalorder %s25, 0
      %p46 = por %p44, %p45
      %p47 = scmp.ne.s32.totalorder %s33, %s34
      %p48 = scmp.eq.s32.totalorder %s26, 5
      %p49 = por %p47, %p48
      %p51 = scmp.ne.s32.totalorder %s34, %s50
      %p52 = scmp.eq.s32.totalorder %s26, 0
      %p53 = por %p51, %p52
      %s54 = ssub.s32 %s20, %s27
      %p55 = scmp.eq.s32.totalorder %s54, 0
      %s57 = sadd.s32 %s56, 1
      %s58 = scalar_select %p55, %s56, %s57
      %p61 = pneg %p55
      %p62 = scmp.eq.s32.totalorder %s20, 5
      %p63 = por %p61, %p62
      %p64 = scmp.ne.s32.totalorder %s56, %s59
      %p65 = scmp.eq.s32.totalorder %s20, 0
      %p66 = por %p64, %p65
      %p67 = scmp.ne.s32.totalorder %s56, %s59
      %p68 = scmp.eq.s32.totalorder %s25, 5
      %p69 = por %p67, %p68
      %p70 = scmp.ne.s32.totalorder %s59, %s60
      %p71 = scmp.eq.s32.totalorder %s25, 0
      %p72 = por %p70, %p71
      %p73 = scmp.ne.s32.totalorder %s59, %s60
      %p74 = scmp.eq.s32.totalorder %s26, 5
      %p75 = por %p73, %p74
      %p77 = scmp.ne.s32.totalorder %s60, %s76
      %p78 = scmp.eq.s32.totalorder %s26, 0
      %p79 = por %p77, %p78
      %s81 = sadd.s32 %s80, 1
      %p84 = scmp.eq.s32.totalorder %s20, 5
      %p85 = scmp.ne.s32.totalorder %s80, %s82
      %p86 = scmp.eq.s32.totalorder %s20, 0
      %p87 = por %p85, %p86
      %p88 = scmp.ne.s32.totalorder %s80, %s82
      %p89 = scmp.eq.s32.totalorder %s25, 5
      %p90 = por %p88, %p89
      %p91 = scmp.ne.s32.totalorder %s82, %s83
      %p92 = scmp.eq.s32.totalorder %s25, 0
      %p93 = por %p91, %p92
      %p94 = scmp.ne.s32.totalorder %s82, %s83
      %p95 = scmp.eq.s32.totalorder %s26, 5
      %p96 = por %p94, %p95
      %p98 = scmp.ne.s32.totalorder %s83, %s97
      %p99 = scmp.eq.s32.totalorder %s26, 0
      %p100 = por %p98, %p99
      %s102 = sadd.s32 %s101, 1
      %p105 = scmp.eq.s32.totalorder %s20, 5
      %p106 = scmp.ne.s32.totalorder %s101, %s103
      %p107 = scmp.eq.s32.totalorder %s20, 0
      %p108 = por %p106, %p107
      %p109 = scmp.ne.s32.totalorder %s101, %s103
      %p110 = scmp.eq.s32.totalorder %s25, 5
      %p111 = por %p109, %p110
      %p112 = scmp.ne.s32.totalorder %s103, %s104
      %p113 = scmp.eq.s32.totalorder %s25, 0
      %p114 = por %p112, %p113
      %p115 = scmp.ne.s32.totalorder %s103, %s104
      %p116 = scmp.eq.s32.totalorder %s26, 5
      %p117 = por %p115, %p116
      %p119 = scmp.ne.s32.totalorder %s104, %s118
      %p120 = scmp.eq.s32.totalorder %s26, 0
      %p121 = por %p119, %p120
      %s123 = sadd.s32 %s122, 1
      %p126 = scmp.eq.s32.totalorder %s20, 5
      %p127 = scmp.ne.s32.totalorder %s122, %s124
      %p128 = scmp.eq.s32.totalorder %s20, 0
      %p129 = por %p127, %p128
      %p130 = scmp.ne.s32.totalorder %s122, %s124
      %p131 = scmp.eq.s32.totalorder %s25, 5
      %p132 = por %p130, %p131
      %p133 = scmp.ne.s32.totalorder %s124, %s125
      %p134 = scmp.eq.s32.totalorder %s25, 0
      %p135 = por %p133, %p134
      %p136 = scmp.ne.s32.totalorder %s124, %s125
      %p137 = scmp.eq.s32.totalorder %s26, 5
      %p138 = por %p136, %p137
      %p140 = scmp.ne.s32.totalorder %s125, %s139
      %p141 = scmp.eq.s32.totalorder %s26, 0
      %p142 = por %p140, %p141
      %s144 = sadd.s32 %s143, 1
      %p147 = scmp.eq.s32.totalorder %s20, 5
      %p148 = scmp.ne.s32.totalorder %s143, %s145
      %p149 = scmp.eq.s32.totalorder %s20, 0
      %p150 = por %p148, %p149
      %p151 = scmp.ne.s32.totalorder %s143, %s145
      %p152 = scmp.eq.s32.totalorder %s25, 5
      %p153 = por %p151, %p152
      %p154 = scmp.ne.s32.totalorder %s145, %s146
      %p155 = scmp.eq.s32.totalorder %s25, 0
      %p156 = por %p154, %p155
      %p157 = scmp.ne.s32.totalorder %s145, %s146
      %p158 = scmp.eq.s32.totalorder %s26, 5
      %p159 = por %p157, %p158
      %p161 = scmp.ne.s32.totalorder %s146, %s160
      %p162 = scmp.eq.s32.totalorder %s26, 0
      %p163 = por %p161, %p162
      %s165 = sadd.s32 %s164, 1
      %p168 = scmp.eq.s32.totalorder %s20, 5
      %p169 = scmp.ne.s32.totalorder %s164, %s166
      %p170 = scmp.eq.s32.totalorder %s20, 0
      %p171 = por %p169, %p170
      %p172 = scmp.ne.s32.totalorder %s164, %s166
      %p173 = scmp.eq.s32.totalorder %s25, 5
      %p174 = por %p172, %p173
      %p175 = scmp.ne.s32.totalorder %s166, %s167
      %p176 = scmp.eq.s32.totalorder %s25, 0
      %p177 = por %p175, %p176
      %p178 = scmp.ne.s32.totalorder %s166, %s167
      %p179 = scmp.eq.s32.totalorder %s26, 5
      %p180 = por %p178, %p179
      %p182 = scmp.ne.s32.totalorder %s167, %s181
      %p183 = scmp.eq.s32.totalorder %s26, 0
      %p184 = por %p182, %p183
      %s186 = sadd.s32 %s185, 1
      %p189 = scmp.eq.s32.totalorder %s20, 5
      %p190 = scmp.ne.s32.totalorder %s185, %s187
      %p191 = scmp.eq.s32.totalorder %s20, 0
      %p192 = por %p190, %p191
      %p193 = scmp.ne.s32.totalorder %s185, %s187
      %p194 = scmp.eq.s32.totalorder %s25, 5
      %p195 = por %p193, %p194
      %p196 = scmp.ne.s32.totalorder %s187, %s188
      %p197 = scmp.eq.s32.totalorder %s25, 0
      %p198 = por %p196, %p197
      %p199 = scmp.ne.s32.totalorder %s187, %s188
      %p200 = scmp.eq.s32.totalorder %s26, 5
      %p201 = por %p199, %p200
      %p203 = scmp.ne.s32.totalorder %s188, %s202
      %p204 = scmp.eq.s32.totalorder %s26, 0
      %p205 = por %p203, %p204
      %s207 = sadd.s32 %s206, 1
      %p210 = scmp.eq.s32.totalorder %s20, 5
      %p211 = scmp.ne.s32.totalorder %s206, %s208
      %p212 = scmp.eq.s32.totalorder %s20, 0
      %p213 = por %p211, %p212
      %p214 = scmp.ne.s32.totalorder %s206, %s208
      %p215 = scmp.eq.s32.totalorder %s25, 5
      %p216 = por %p214, %p215
      %p217 = scmp.ne.s32.totalorder %s208, %s209
      %p218 = scmp.eq.s32.totalorder %s25, 0
      %p219 = por %p217, %p218
      %p220 = scmp.ne.s32.totalorder %s208, %s209
      %p221 = scmp.eq.s32.totalorder %s26, 5
      %p222 = por %p220, %p221
      %p224 = scmp.ne.s32.totalorder %s209, %s223
      %p225 = scmp.eq.s32.totalorder %s26, 0
      %p226 = por %p224, %p225
      %s228 = sadd.s32 %s227, 1
      %p231 = scmp.eq.s32.totalorder %s20, 5
      %p232 = scmp.ne.s32.totalorder %s227, %s229
      %p233 = scmp.eq.s32.totalorder %s20, 0
      %p234 = por %p232, %p233
      %p235 = scmp.ne.s32.totalorder %s227, %s229
      %p236 = scmp.eq.s32.totalorder %s25, 5
      %p237 = por %p235, %p236
      %p238 = scmp.ne.s32.totalorder %s229, %s230
      %p239 = scmp.eq.s32.totalorder %s25, 0
      %p240 = por %p238, %p239
      %p241 = scmp.ne.s32.totalorder %s229, %s230
      %p242 = scmp.eq.s32.totalorder %s26, 5
      %p243 = por %p241, %p242
      %p245 = scmp.ne.s32.totalorder %s230, %s244
      %p246 = scmp.eq.s32.totalorder %s26, 0
      %p247 = por %p245, %p246
      %p248 = scmp.le.s32.totalorder 1, %s20
      %p249 = scmp.lt.s32.totalorder %s20, 7
      %p250 = pnand %p248, %p249
      %p251 = pneg %p250
      // Predicated region
      $region9: #{lenet_forward.3} parent=5 // pred_check
        _
      $region10: #{lenet_forward.3} parent=5 // pred_check_branch
        %253 = sbr.rel (%p250) target = $region12
      $region11: #{lenet_forward.3} parent=5 // pred_region
        %s254 = ssub.s32 %s20, 1
        // Predicated region
        $region13: #{lenet_forward.3} parent=11 // pred_check
          %p255 = pneg %p93
        $region14: #{lenet_forward.3} parent=11 // pred_check_branch
          %257 = sbr.rel (%p255) target = $region16
        $region15: #{lenet_forward.3} parent=11 // pred_region
          %s259 = ssub.s32 64, 64
          %260 = vsyncadd [#allocation6], %s259
          %s262 = sshll.u32 [#allocation5], 4
          %s263 = int_to_ptr.vmem [resolvable:$true] %s262
          %265 = dma.hbm_to_vmem [thread:$0]  %s2, 64, %s263, [#allocation6]
        $region16: #{lenet_forward.3} parent=11 // pred_fallthru
          _
        // Predicated region
        $region17: #{lenet_forward.3} parent=11 // pred_check
          %p266 = pneg %p114
        $region18: #{lenet_forward.3} parent=11 // pred_check_branch
          %268 = sbr.rel (%p266) target = $region20
        $region19: #{lenet_forward.3} parent=11 // pred_region
          %s270 = ssub.s32 8192, 8192
          %271 = vsyncadd [#allocation6], %s270
          %s272 = sshll.u32 [#allocation7], 4
          %s273 = int_to_ptr.vmem [resolvable:$true] %s272
          %278 = dma.hbm_to_vmem [thread:$0]  %s3, 8192, %s273, [#allocation6], 128, 128, 8
        $region20: #{lenet_forward.3} parent=11 // pred_fallthru
          _
        // Predicated region
        $region21: #{lenet_forward.3} parent=11 // pred_check
          %p279 = pneg %p135
        $region22: #{lenet_forward.3} parent=11 // pred_check_branch
          %281 = sbr.rel (%p279) target = $region24
        $region23: #{lenet_forward.3} parent=11 // pred_region
          %s283 = ssub.s32 32, 32
          %284 = vsyncadd [#allocation9], %s283
          %s286 = sshll.u32 [#allocation8], 4
          %s287 = int_to_ptr.vmem [resolvable:$true] %s286
          %289 = dma.hbm_to_vmem [thread:$0]  %s4, 32, %s287, [#allocation9]
        $region24: #{lenet_forward.3} parent=11 // pred_fallthru
          _
        // Predicated region
        $region25: #{lenet_forward.3} parent=11 // pred_check
          %p290 = pneg %p156
        $region26: #{lenet_forward.3} parent=11 // pred_check_branch
          %292 = sbr.rel (%p290) target = $region28
        $region27: #{lenet_forward.3} parent=11 // pred_region
          _
        $region28: #{lenet_forward.3} parent=11 // pred_fallthru
          _
        // Predicated region
        $region29: #{lenet_forward.3} parent=11 // pred_check
          %p293 = pneg %p177
        $region30: #{lenet_forward.3} parent=11 // pred_check_branch
          %295 = sbr.rel (%p293) target = $region32
        $region31: #{lenet_forward.3} parent=11 // pred_region
          %s297 = ssub.s32 16, 16
          %298 = vsyncadd [#allocation9], %s297
          %s300 = sshll.u32 [#allocation10], 4
          %s301 = int_to_ptr.vmem [resolvable:$true] %s300
          %303 = dma.hbm_to_vmem [thread:$0]  %s6, 16, %s301, [#allocation9]
        $region32: #{lenet_forward.3} parent=11 // pred_fallthru
          _
        // Predicated region
        $region33: #{lenet_forward.3} parent=11 // pred_check
          %p304 = pneg %p198
        $region34: #{lenet_forward.3} parent=11 // pred_check_branch
          %306 = sbr.rel (%p304) target = $region36
        $region35: #{lenet_forward.3} parent=11 // pred_region
          _
        $region36: #{lenet_forward.3} parent=11 // pred_fallthru
          _
        // Predicated region
        $region37: #{lenet_forward.3} parent=11 // pred_check
          %p307 = pneg %p219
        $region38: #{lenet_forward.3} parent=11 // pred_check_branch
          %309 = sbr.rel (%p307) target = $region40
        $region39: #{lenet_forward.3} parent=11 // pred_region
          _
        $region40: #{lenet_forward.3} parent=11 // pred_fallthru
          _
      $region12: #{lenet_forward.3} parent=5 // pred_fallthru
        _
      %p310 = scmp.lt.s32.totalorder %s20, 6
      // Predicated region
      $region41: #{lenet_forward.3} parent=5 // pred_check
        %p311 = pneg %p310
      $region42: #{lenet_forward.3} parent=5 // pred_check_branch
        %313 = sbr.rel (%p311) target = $region44
      $region43: #{lenet_forward.3} parent=5 // pred_region
        // Predicated region
        $region45: #{lenet_forward.3} parent=43 // pred_check
          %p314 = pneg %p40
        $region46: #{lenet_forward.3} parent=43 // pred_check_branch
          %316 = sbr.rel (%p314) target = $region48
        $region47: #{lenet_forward.3} parent=43 // pred_region
          %s317 = smul.u32 4, %s20
          %p318 = scmp.lt.s32.totalorder %s317, 23
          %s319 = scalar_select %p318, %s317, 23
          %s320 = smul.addr %s319, 4
          %s321 = scalar_lea.vmem %s0, %s320
          %s322 = smul.u32 4, %s20
        $region48: #{lenet_forward.3} parent=43 // pred_fallthru
          _
        // Predicated region
        $region49: #{lenet_forward.3} parent=43 // pred_check
          %p323 = pneg %p66
        $region50: #{lenet_forward.3} parent=43 // pred_check_branch
          %325 = sbr.rel (%p323) target = $region52
        $region51: #{lenet_forward.3} parent=43 // pred_region
          %s326 = sand.u32 %s56, 1
          %s327 = scalar_lea.sflag [#allocation4], %s326
          %s328 = sand.u32 %s56, 1
          %s329 = smul.addr %s328, 1024
          %s330 = scalar_lea.vmem [#allocation3], %s329
          %s331 = smul.u32 64, %s20
          %s333 = ssub.s32 16384, 16384
          %334 = vsyncadd %s327, %s333
          %s335 = smul.addr %s331, 4
          %s336 = smul.addr %s335, 64
          %s337 = scalar_lea.hbm %s1, %s336
          %s338 = sshll.u32 %s330, 4
          %s339 = int_to_ptr.vmem [resolvable:$true] %s338
          %344 = dma.hbm_to_vmem [thread:$0]  %s337, 16384, %s339, %s327, 256, 256, 16
        $region52: #{lenet_forward.3} parent=43 // pred_fallthru
          _
      $region44: #{lenet_forward.3} parent=5 // pred_fallthru
        _
      %p345 = scmp.le.s32.totalorder 1, %s20
      %p346 = scmp.lt.s32.totalorder %s20, 7
      %p347 = pnand %p345, %p346
      %p348 = pneg %p347
      // Predicated region
      $region53: #{lenet_forward.3} parent=5 // pred_check
        _
      $region54: #{lenet_forward.3} parent=5 // pred_check_branch
        %350 = sbr.rel (%p347) target = $region56
      $region55: #{lenet_forward.3} parent=5 // pred_region
        %s351 = ssub.s32 %s20, 1
        %s352 = sand.u32 %s59, 1
        %s353 = scalar_lea.sflag [#allocation4], %s352
        %s354 = sand.u32 %s59, 1
        %s355 = smul.addr %s354, 1024
        %s356 = scalar_lea.vmem [#allocation3], %s355
        // Predicated region
        $region57: #{lenet_forward.3} parent=55 // pred_check
          %p357 = pneg %p72
        $region58: #{lenet_forward.3} parent=55 // pred_check_branch
          %359 = sbr.rel (%p357) target = $region60
        $region59: #{lenet_forward.3} parent=55 // pred_region
          %360 = dma.done %s353, 16384
        $region60: #{lenet_forward.3} parent=55 // pred_fallthru
          _
        // Predicated region
        $region61: #{lenet_forward.3} parent=55 // pred_check
          %p361 = pneg %p93
        $region62: #{lenet_forward.3} parent=55 // pred_check_branch
          %363 = sbr.rel (%p361) target = $region64
        $region63: #{lenet_forward.3} parent=55 // pred_region
          %364 = dma.done [#allocation6], 64
        $region64: #{lenet_forward.3} parent=55 // pred_fallthru
          _
        // Predicated region
        $region65: #{lenet_forward.3} parent=55 // pred_check
          %p365 = pneg %p114
        $region66: #{lenet_forward.3} parent=55 // pred_check_branch
          %367 = sbr.rel (%p365) target = $region68
        $region67: #{lenet_forward.3} parent=55 // pred_region
          %368 = dma.done [#allocation6], 8192
        $region68: #{lenet_forward.3} parent=55 // pred_fallthru
          _
        // Predicated region
        $region69: #{lenet_forward.3} parent=55 // pred_check
          %p369 = pneg %p135
        $region70: #{lenet_forward.3} parent=55 // pred_check_branch
          %371 = sbr.rel (%p369) target = $region72
        $region71: #{lenet_forward.3} parent=55 // pred_region
          %372 = dma.done [#allocation9], 32
        $region72: #{lenet_forward.3} parent=55 // pred_fallthru
          _
        // Predicated region
        $region73: #{lenet_forward.3} parent=55 // pred_check
          %p373 = pneg %p177
        $region74: #{lenet_forward.3} parent=55 // pred_check_branch
          %375 = sbr.rel (%p373) target = $region76
        $region75: #{lenet_forward.3} parent=55 // pred_region
          %376 = dma.done [#allocation9], 16
        $region76: #{lenet_forward.3} parent=55 // pred_fallthru
          _
        %s377 = smul.u32 4, %s25
        %p378 = scmp.lt.s32.totalorder %s377, 23
        %s379 = scalar_select %p378, %s377, 23
        %s380 = smul.addr %s379, 4
        %s381 = scalar_lea.vmem %s0, %s380
        %p382 = pneg %p46
        %p383 = pneg %p43
        %s384 = sand.u32 %s59, 1
        %s385 = scalar_lea.sflag [#allocation4], %s384
        %s386 = sand.u32 %s59, 1
        %s387 = smul.addr %s386, 1024
        %s388 = scalar_lea.vmem [#allocation3], %s387
        %p389 = pneg %p72
        %p390 = pneg %p69
        %p391 = pneg %p93
        %p392 = pneg %p90
        %p393 = pneg %p114
        %p394 = pneg %p111
        %p395 = pneg %p135
        %p396 = pneg %p132
        %p397 = pneg %p156
        %p398 = pneg %p153
        %p399 = pneg %p177
        %p400 = pneg %p174
        %p401 = pneg %p198
        %p402 = pneg %p195
        %p403 = pneg %p219
        %p404 = pneg %p216
        %p405 = pneg %p240
        %p406 = pneg %p237
        %s407 = smul.u32 4, %s25
        %p408 = scmp.lt.s32.totalorder %s407, 23
        %s409 = scalar_select %p408, %s407, 23
        %s410 = smul.addr %s409, 4
        %s411 = scalar_lea.vmem %s0, %s410
        %s412 = smul.u32 4, %s25
        %s413 = smul.u32 64, %s25
        %p415 = scmp.eq.s32.totalorder %s25, 0
        // Predicated region
        $region77: #{lenet_forward.3} parent=55 // pred_check
          %p416 = pneg %p415
        $region78: #{lenet_forward.3} parent=55 // pred_check_branch
          %418 = sbr.rel (%p416) target = $region80
        $region79: #{lenet_forward.3} parent=55 // pred_region
          %419 = vst [vmem:[#allocation2] sm:$0xff] 0.0
          %420 = vst [vmem:[#allocation2 + $0x8] sm:$0xff] 0.0
          %421 = vst [vmem:[#allocation2 + $0x10] sm:$0xff] 0.0
          %422 = vst [vmem:[#allocation2 + $0x18] sm:$0xff] 0.0
        $region80: #{lenet_forward.3} parent=55 // pred_fallthru
          _
        %v423 = vld [vmem:[#allocation2] sm:$0xff]
        %v424 = vld [vmem:[#allocation2 + $0x8] sm:$0xff]
        %v425 = vld [vmem:[#allocation2 + $0x10] sm:$0xff]
        %v426 = vld [vmem:[#allocation2 + $0x18] sm:$0xff]
        %v427 = vld [vmem:[%s411] sm:$0xff]
        %v428 = vld [vmem:[%s411 + $0x8] sm:$0xff]
        %v429 = vld [vmem:[%s356] sm:$0xff]
        %v430 = vld [vmem:[%s356 + $0x8] sm:$0xff]
        %v431 = vld [vmem:[%s356 + $0x10] sm:$0xff]
        %v432 = vld [vmem:[%s356 + $0x18] sm:$0xff]
        %v433 = vld [vmem:[%s356 + $0x20] sm:$0xff]
        %v434 = vld [vmem:[%s356 + $0x28] sm:$0xff]
        %v435 = vld [vmem:[%s356 + $0x30] sm:$0xff]
        %v436 = vld [vmem:[%s356 + $0x38] sm:$0xff]
        %v437 = vld [vmem:[%s356 + $0x40] sm:$0xff]
        %v438 = vld [vmem:[%s356 + $0x48] sm:$0xff]
        %v439 = vld [vmem:[%s356 + $0x50] sm:$0xff]
        %v440 = vld [vmem:[%s356 + $0x58] sm:$0xff]
        %v441 = vld [vmem:[%s356 + $0x60] sm:$0xff]
        %v442 = vld [vmem:[%s356 + $0x68] sm:$0xff]
        %v443 = vld [vmem:[%s356 + $0x70] sm:$0xff]
        %v444 = vld [vmem:[%s356 + $0x78] sm:$0xff]
        %v445 = vld [vmem:[%s356 + $0x80] sm:$0xff]
        %v446 = vld [vmem:[%s356 + $0x88] sm:$0xff]
        %v447 = vld [vmem:[%s356 + $0x90] sm:$0xff]
        %v448 = vld [vmem:[%s356 + $0x98] sm:$0xff]
        %v449 = vld [vmem:[%s356 + $0xa0] sm:$0xff]
        %v450 = vld [vmem:[%s356 + $0xa8] sm:$0xff]
        %v451 = vld [vmem:[%s356 + $0xb0] sm:$0xff]
        %v452 = vld [vmem:[%s356 + $0xb8] sm:$0xff]
        %v453 = vld [vmem:[%s356 + $0xc0] sm:$0xff]
        %v454 = vld [vmem:[%s356 + $0xc8] sm:$0xff]
        %v455 = vld [vmem:[%s356 + $0xd0] sm:$0xff]
        %v456 = vld [vmem:[%s356 + $0xd8] sm:$0xff]
        %v457 = vld [vmem:[%s356 + $0xe0] sm:$0xff]
        %v458 = vld [vmem:[%s356 + $0xe8] sm:$0xff]
        %v459 = vld [vmem:[%s356 + $0xf0] sm:$0xff]
        %v460 = vld [vmem:[%s356 + $0xf8] sm:$0xff]
        %v461 = vld [vmem:[%s356 + $0x100] sm:$0xff]
        %v462 = vld [vmem:[%s356 + $0x108] sm:$0xff]
        %v463 = vld [vmem:[%s356 + $0x110] sm:$0xff]
        %v464 = vld [vmem:[%s356 + $0x118] sm:$0xff]
        %v465 = vld [vmem:[%s356 + $0x120] sm:$0xff]
        %v466 = vld [vmem:[%s356 + $0x128] sm:$0xff]
        %v467 = vld [vmem:[%s356 + $0x130] sm:$0xff]
        %v468 = vld [vmem:[%s356 + $0x138] sm:$0xff]
        %v469 = vld [vmem:[%s356 + $0x140] sm:$0xff]
        %v470 = vld [vmem:[%s356 + $0x148] sm:$0xff]
        %v471 = vld [vmem:[%s356 + $0x150] sm:$0xff]
        %v472 = vld [vmem:[%s356 + $0x158] sm:$0xff]
        %v473 = vld [vmem:[%s356 + $0x160] sm:$0xff]
        %v474 = vld [vmem:[%s356 + $0x168] sm:$0xff]
        %v475 = vld [vmem:[%s356 + $0x170] sm:$0xff]
        %v476 = vld [vmem:[%s356 + $0x178] sm:$0xff]
        %v477 = vld [vmem:[%s356 + $0x180] sm:$0xff]
        %v478 = vld [vmem:[%s356 + $0x188] sm:$0xff]
        %v479 = vld [vmem:[%s356 + $0x190] sm:$0xff]
        %v480 = vld [vmem:[%s356 + $0x198] sm:$0xff]
        %v481 = vld [vmem:[%s356 + $0x1a0] sm:$0xff]
        %v482 = vld [vmem:[%s356 + $0x1a8] sm:$0xff]
        %v483 = vld [vmem:[%s356 + $0x1b0] sm:$0xff]
        %v484 = vld [vmem:[%s356 + $0x1b8] sm:$0xff]
        %v485 = vld [vmem:[%s356 + $0x1c0] sm:$0xff]
        %v486 = vld [vmem:[%s356 + $0x1c8] sm:$0xff]
        %v487 = vld [vmem:[%s356 + $0x1d0] sm:$0xff]
        %v488 = vld [vmem:[%s356 + $0x1d8] sm:$0xff]
        %v489 = vld [vmem:[%s356 + $0x1e0] sm:$0xff]
        %v490 = vld [vmem:[%s356 + $0x1e8] sm:$0xff]
        %v491 = vld [vmem:[%s356 + $0x1f0] sm:$0xff]
        %v492 = vld [vmem:[%s356 + $0x1f8] sm:$0xff]
        %v493 = vld [vmem:[%s356 + $0x200] sm:$0xff]
        %v494 = vld [vmem:[%s356 + $0x208] sm:$0xff]
        %v495 = vld [vmem:[%s356 + $0x210] sm:$0xff]
        %v496 = vld [vmem:[%s356 + $0x218] sm:$0xff]
        %v497 = vld [vmem:[%s356 + $0x220] sm:$0xff]
        %v498 = vld [vmem:[%s356 + $0x228] sm:$0xff]
        %v499 = vld [vmem:[%s356 + $0x230] sm:$0xff]
        %v500 = vld [vmem:[%s356 + $0x238] sm:$0xff]
        %v501 = vld [vmem:[%s356 + $0x240] sm:$0xff]
        %v502 = vld [vmem:[%s356 + $0x248] sm:$0xff]
        %v503 = vld [vmem:[%s356 + $0x250] sm:$0xff]
        %v504 = vld [vmem:[%s356 + $0x258] sm:$0xff]
        %v505 = vld [vmem:[%s356 + $0x260] sm:$0xff]
        %v506 = vld [vmem:[%s356 + $0x268] sm:$0xff]
        %v507 = vld [vmem:[%s356 + $0x270] sm:$0xff]
        %v508 = vld [vmem:[%s356 + $0x278] sm:$0xff]
        %v509 = vld [vmem:[%s356 + $0x280] sm:$0xff]
        %v510 = vld [vmem:[%s356 + $0x288] sm:$0xff]
        %v511 = vld [vmem:[%s356 + $0x290] sm:$0xff]
        %v512 = vld [vmem:[%s356 + $0x298] sm:$0xff]
        %v513 = vld [vmem:[%s356 + $0x2a0] sm:$0xff]
        %v514 = vld [vmem:[%s356 + $0x2a8] sm:$0xff]
        %v515 = vld [vmem:[%s356 + $0x2b0] sm:$0xff]
        %v516 = vld [vmem:[%s356 + $0x2b8] sm:$0xff]
        %v517 = vld [vmem:[%s356 + $0x2c0] sm:$0xff]
        %v518 = vld [vmem:[%s356 + $0x2c8] sm:$0xff]
        %v519 = vld [vmem:[%s356 + $0x2d0] sm:$0xff]
        %v520 = vld [vmem:[%s356 + $0x2d8] sm:$0xff]
        %v521 = vld [vmem:[%s356 + $0x2e0] sm:$0xff]
        %v522 = vld [vmem:[%s356 + $0x2e8] sm:$0xff]
        %v523 = vld [vmem:[%s356 + $0x2f0] sm:$0xff]
        %v524 = vld [vmem:[%s356 + $0x2f8] sm:$0xff]
        %v525 = vld [vmem:[%s356 + $0x300] sm:$0xff]
        %v526 = vld [vmem:[%s356 + $0x308] sm:$0xff]
        %v527 = vld [vmem:[%s356 + $0x310] sm:$0xff]
        %v528 = vld [vmem:[%s356 + $0x318] sm:$0xff]
        %v529 = vld [vmem:[%s356 + $0x320] sm:$0xff]
        %v530 = vld [vmem:[%s356 + $0x328] sm:$0xff]
        %v531 = vld [vmem:[%s356 + $0x330] sm:$0xff]
        %v532 = vld [vmem:[%s356 + $0x338] sm:$0xff]
        %v533 = vld [vmem:[%s356 + $0x340] sm:$0xff]
        %v534 = vld [vmem:[%s356 + $0x348] sm:$0xff]
        %v535 = vld [vmem:[%s356 + $0x350] sm:$0xff]
        %v536 = vld [vmem:[%s356 + $0x358] sm:$0xff]
        %v537 = vld [vmem:[%s356 + $0x360] sm:$0xff]
        %v538 = vld [vmem:[%s356 + $0x368] sm:$0xff]
        %v539 = vld [vmem:[%s356 + $0x370] sm:$0xff]
        %v540 = vld [vmem:[%s356 + $0x378] sm:$0xff]
        %v541 = vld [vmem:[%s356 + $0x380] sm:$0xff]
        %v542 = vld [vmem:[%s356 + $0x388] sm:$0xff]
        %v543 = vld [vmem:[%s356 + $0x390] sm:$0xff]
        %v544 = vld [vmem:[%s356 + $0x398] sm:$0xff]
        %v545 = vld [vmem:[%s356 + $0x3a0] sm:$0xff]
        %v546 = vld [vmem:[%s356 + $0x3a8] sm:$0xff]
        %v547 = vld [vmem:[%s356 + $0x3b0] sm:$0xff]
        %v548 = vld [vmem:[%s356 + $0x3b8] sm:$0xff]
        %v549 = vld [vmem:[%s356 + $0x3c0] sm:$0xff]
        %v550 = vld [vmem:[%s356 + $0x3c8] sm:$0xff]
        %v551 = vld [vmem:[%s356 + $0x3d0] sm:$0xff]
        %v552 = vld [vmem:[%s356 + $0x3d8] sm:$0xff]
        %v553 = vld [vmem:[%s356 + $0x3e0] sm:$0xff]
        %v554 = vld [vmem:[%s356 + $0x3e8] sm:$0xff]
        %v555 = vld [vmem:[%s356 + $0x3f0] sm:$0xff]
        %v556 = vld [vmem:[%s356 + $0x3f8] sm:$0xff]
        %v559 = vunpack.c.l.b16 %v427
        %v560 = vunpack.c.h.b16 %v427
        %v561 = vunpack.c.l.b16 %v428
        %v562 = vunpack.c.h.b16 %v428
        %v563 = vpack.c.b16 %v559, %v559
        %v564 = vpack.c.b16 %v560, %v560
        %v565 = vpack.c.b16 %v561, %v561
        %v566 = vpack.c.b16 %v562, %v562
        %v699 = vunpack.c.l.b16 %v429
        %v700 = vunpack.c.h.b16 %v429
        %v701 = vunpack.c.l.b16 %v430
        %v702 = vunpack.c.h.b16 %v430
        %v703 = vunpack.c.l.b16 %v431
        %v704 = vunpack.c.h.b16 %v431
        %v705 = vunpack.c.l.b16 %v432
        %v706 = vunpack.c.h.b16 %v432
        %v707 = vunpack.c.l.b16 %v433
        %v708 = vunpack.c.h.b16 %v433
        %v709 = vunpack.c.l.b16 %v434
        %v710 = vunpack.c.h.b16 %v434
        %v711 = vunpack.c.l.b16 %v435
        %v712 = vunpack.c.h.b16 %v435
        %v713 = vunpack.c.l.b16 %v436
        %v714 = vunpack.c.h.b16 %v436
        %v715 = vunpack.c.l.b16 %v437
        %v716 = vunpack.c.h.b16 %v437
        %v717 = vunpack.c.l.b16 %v438
        %v718 = vunpack.c.h.b16 %v438
        %v719 = vunpack.c.l.b16 %v439
        %v720 = vunpack.c.h.b16 %v439
        %v721 = vunpack.c.l.b16 %v440
        %v722 = vunpack.c.h.b16 %v440
        %v723 = vunpack.c.l.b16 %v441
        %v724 = vunpack.c.h.b16 %v441
        %v725 = vunpack.c.l.b16 %v442
        %v726 = vunpack.c.h.b16 %v442
        %v727 = vunpack.c.l.b16 %v443
        %v728 = vunpack.c.h.b16 %v443
        %v729 = vunpack.c.l.b16 %v444
        %v730 = vunpack.c.h.b16 %v444
        %v731 = vunpack.c.l.b16 %v445
        %v732 = vunpack.c.h.b16 %v445
        %v733 = vunpack.c.l.b16 %v446
        %v734 = vunpack.c.h.b16 %v446
        %v735 = vunpack.c.l.b16 %v447
        %v736 = vunpack.c.h.b16 %v447
        %v737 = vunpack.c.l.b16 %v448
        %v738 = vunpack.c.h.b16 %v448
        %v739 = vunpack.c.l.b16 %v449
        %v740 = vunpack.c.h.b16 %v449
        %v741 = vunpack.c.l.b16 %v450
        %v742 = vunpack.c.h.b16 %v450
        %v743 = vunpack.c.l.b16 %v451
        %v744 = vunpack.c.h.b16 %v451
        %v745 = vunpack.c.l.b16 %v452
        %v746 = vunpack.c.h.b16 %v452
        %v747 = vunpack.c.l.b16 %v453
        %v748 = vunpack.c.h.b16 %v453
        %v749 = vunpack.c.l.b16 %v454
        %v750 = vunpack.c.h.b16 %v454
        %v751 = vunpack.c.l.b16 %v455
        %v752 = vunpack.c.h.b16 %v455
        %v753 = vunpack.c.l.b16 %v456
        %v754 = vunpack.c.h.b16 %v456
        %v755 = vunpack.c.l.b16 %v457
        %v756 = vunpack.c.h.b16 %v457
        %v757 = vunpack.c.l.b16 %v458
        %v758 = vunpack.c.h.b16 %v458
        %v759 = vunpack.c.l.b16 %v459
        %v760 = vunpack.c.h.b16 %v459
        %v761 = vunpack.c.l.b16 %v460
        %v762 = vunpack.c.h.b16 %v460
        %v763 = vunpack.c.l.b16 %v461
        %v764 = vunpack.c.h.b16 %v461
        %v765 = vunpack.c.l.b16 %v462
        %v766 = vunpack.c.h.b16 %v462
        %v767 = vunpack.c.l.b16 %v463
        %v768 = vunpack.c.h.b16 %v463
        %v769 = vunpack.c.l.b16 %v464
        %v770 = vunpack.c.h.b16 %v464
        %v771 = vunpack.c.l.b16 %v465
        %v772 = vunpack.c.h.b16 %v465
        %v773 = vunpack.c.l.b16 %v466
        %v774 = vunpack.c.h.b16 %v466
        %v775 = vunpack.c.l.b16 %v467
        %v776 = vunpack.c.h.b16 %v467
        %v777 = vunpack.c.l.b16 %v468
        %v778 = vunpack.c.h.b16 %v468
        %v779 = vunpack.c.l.b16 %v469
        %v780 = vunpack.c.h.b16 %v469
        %v781 = vunpack.c.l.b16 %v470
        %v782 = vunpack.c.h.b16 %v470
        %v783 = vunpack.c.l.b16 %v471
        %v784 = vunpack.c.h.b16 %v471
        %v785 = vunpack.c.l.b16 %v472
        %v786 = vunpack.c.h.b16 %v472
        %v787 = vunpack.c.l.b16 %v473
        %v788 = vunpack.c.h.b16 %v473
        %v789 = vunpack.c.l.b16 %v474
        %v790 = vunpack.c.h.b16 %v474
        %v791 = vunpack.c.l.b16 %v475
        %v792 = vunpack.c.h.b16 %v475
        %v793 = vunpack.c.l.b16 %v476
        %v794 = vunpack.c.h.b16 %v476
        %v795 = vunpack.c.l.b16 %v477
        %v796 = vunpack.c.h.b16 %v477
        %v797 = vunpack.c.l.b16 %v478
        %v798 = vunpack.c.h.b16 %v478
        %v799 = vunpack.c.l.b16 %v479
        %v800 = vunpack.c.h.b16 %v479
        %v801 = vunpack.c.l.b16 %v480
        %v802 = vunpack.c.h.b16 %v480
        %v803 = vunpack.c.l.b16 %v481
        %v804 = vunpack.c.h.b16 %v481
        %v805 = vunpack.c.l.b16 %v482
        %v806 = vunpack.c.h.b16 %v482
        %v807 = vunpack.c.l.b16 %v483
        %v808 = vunpack.c.h.b16 %v483
        %v809 = vunpack.c.l.b16 %v484
        %v810 = vunpack.c.h.b16 %v484
        %v811 = vunpack.c.l.b16 %v485
        %v812 = vunpack.c.h.b16 %v485
        %v813 = vunpack.c.l.b16 %v486
        %v814 = vunpack.c.h.b16 %v486
        %v815 = vunpack.c.l.b16 %v487
        %v816 = vunpack.c.h.b16 %v487
        %v817 = vunpack.c.l.b16 %v488
        %v818 = vunpack.c.h.b16 %v488
        %v819 = vunpack.c.l.b16 %v489
        %v820 = vunpack.c.h.b16 %v489
        %v821 = vunpack.c.l.b16 %v490
        %v822 = vunpack.c.h.b16 %v490
        %v823 = vunpack.c.l.b16 %v491
        %v824 = vunpack.c.h.b16 %v491
        %v825 = vunpack.c.l.b16 %v492
        %v826 = vunpack.c.h.b16 %v492
        %v827 = vunpack.c.l.b16 %v493
        %v828 = vunpack.c.h.b16 %v493
        %v829 = vunpack.c.l.b16 %v494
        %v830 = vunpack.c.h.b16 %v494
        %v831 = vunpack.c.l.b16 %v495
        %v832 = vunpack.c.h.b16 %v495
        %v833 = vunpack.c.l.b16 %v496
        %v834 = vunpack.c.h.b16 %v496
        %v835 = vunpack.c.l.b16 %v497
        %v836 = vunpack.c.h.b16 %v497
        %v837 = vunpack.c.l.b16 %v498
        %v838 = vunpack.c.h.b16 %v498
        %v839 = vunpack.c.l.b16 %v499
        %v840 = vunpack.c.h.b16 %v499
        %v841 = vunpack.c.l.b16 %v500
        %v842 = vunpack.c.h.b16 %v500
        %v843 = vunpack.c.l.b16 %v501
        %v844 = vunpack.c.h.b16 %v501
        %v845 = vunpack.c.l.b16 %v502
        %v846 = vunpack.c.h.b16 %v502
        %v847 = vunpack.c.l.b16 %v503
        %v848 = vunpack.c.h.b16 %v503
        %v849 = vunpack.c.l.b16 %v504
        %v850 = vunpack.c.h.b16 %v504
        %v851 = vunpack.c.l.b16 %v505
        %v852 = vunpack.c.h.b16 %v505
        %v853 = vunpack.c.l.b16 %v506
        %v854 = vunpack.c.h.b16 %v506
        %v855 = vunpack.c.l.b16 %v507
        %v856 = vunpack.c.h.b16 %v507
        %v857 = vunpack.c.l.b16 %v508
        %v858 = vunpack.c.h.b16 %v508
        %v859 = vunpack.c.l.b16 %v509
        %v860 = vunpack.c.h.b16 %v509
        %v861 = vunpack.c.l.b16 %v510
        %v862 = vunpack.c.h.b16 %v510
        %v863 = vunpack.c.l.b16 %v511
        %v864 = vunpack.c.h.b16 %v511
        %v865 = vunpack.c.l.b16 %v512
        %v866 = vunpack.c.h.b16 %v512
        %v867 = vunpack.c.l.b16 %v513
        %v868 = vunpack.c.h.b16 %v513
        %v869 = vunpack.c.l.b16 %v514
        %v870 = vunpack.c.h.b16 %v514
        %v871 = vunpack.c.l.b16 %v515
        %v872 = vunpack.c.h.b16 %v515
        %v873 = vunpack.c.l.b16 %v516
        %v874 = vunpack.c.h.b16 %v516
        %v875 = vunpack.c.l.b16 %v517
        %v876 = vunpack.c.h.b16 %v517
        %v877 = vunpack.c.l.b16 %v518
        %v878 = vunpack.c.h.b16 %v518
        %v879 = vunpack.c.l.b16 %v519
        %v880 = vunpack.c.h.b16 %v519
        %v881 = vunpack.c.l.b16 %v520
        %v882 = vunpack.c.h.b16 %v520
        %v883 = vunpack.c.l.b16 %v521
        %v884 = vunpack.c.h.b16 %v521
        %v885 = vunpack.c.l.b16 %v522
        %v886 = vunpack.c.h.b16 %v522
        %v887 = vunpack.c.l.b16 %v523
        %v888 = vunpack.c.h.b16 %v523
        %v889 = vunpack.c.l.b16 %v524
        %v890 = vunpack.c.h.b16 %v524
        %v891 = vunpack.c.l.b16 %v525
        %v892 = vunpack.c.h.b16 %v525
        %v893 = vunpack.c.l.b16 %v526
        %v894 = vunpack.c.h.b16 %v526
        %v895 = vunpack.c.l.b16 %v527
        %v896 = vunpack.c.h.b16 %v527
        %v897 = vunpack.c.l.b16 %v528
        %v898 = vunpack.c.h.b16 %v528
        %v899 = vunpack.c.l.b16 %v529
        %v900 = vunpack.c.h.b16 %v529
        %v901 = vunpack.c.l.b16 %v530
        %v902 = vunpack.c.h.b16 %v530
        %v903 = vunpack.c.l.b16 %v531
        %v904 = vunpack.c.h.b16 %v531
        %v905 = vunpack.c.l.b16 %v532
        %v906 = vunpack.c.h.b16 %v532
        %v907 = vunpack.c.l.b16 %v533
        %v908 = vunpack.c.h.b16 %v533
        %v909 = vunpack.c.l.b16 %v534
        %v910 = vunpack.c.h.b16 %v534
        %v911 = vunpack.c.l.b16 %v535
        %v912 = vunpack.c.h.b16 %v535
        %v913 = vunpack.c.l.b16 %v536
        %v914 = vunpack.c.h.b16 %v536
        %v915 = vunpack.c.l.b16 %v537
        %v916 = vunpack.c.h.b16 %v537
        %v917 = vunpack.c.l.b16 %v538
        %v918 = vunpack.c.h.b16 %v538
        %v919 = vunpack.c.l.b16 %v539
        %v920 = vunpack.c.h.b16 %v539
        %v921 = vunpack.c.l.b16 %v540
        %v922 = vunpack.c.h.b16 %v540
        %v923 = vunpack.c.l.b16 %v541
        %v924 = vunpack.c.h.b16 %v541
        %v925 = vunpack.c.l.b16 %v542
        %v926 = vunpack.c.h.b16 %v542
        %v927 = vunpack.c.l.b16 %v543
        %v928 = vunpack.c.h.b16 %v543
        %v929 = vunpack.c.l.b16 %v544
        %v930 = vunpack.c.h.b16 %v544
        %v931 = vunpack.c.l.b16 %v545
        %v932 = vunpack.c.h.b16 %v545
        %v933 = vunpack.c.l.b16 %v546
        %v934 = vunpack.c.h.b16 %v546
        %v935 = vunpack.c.l.b16 %v547
        %v936 = vunpack.c.h.b16 %v547
        %v937 = vunpack.c.l.b16 %v548
        %v938 = vunpack.c.h.b16 %v548
        %v939 = vunpack.c.l.b16 %v549
        %v940 = vunpack.c.h.b16 %v549
        %v941 = vunpack.c.l.b16 %v550
        %v942 = vunpack.c.h.b16 %v550
        %v943 = vunpack.c.l.b16 %v551
        %v944 = vunpack.c.h.b16 %v551
        %v945 = vunpack.c.l.b16 %v552
        %v946 = vunpack.c.h.b16 %v552
        %v947 = vunpack.c.l.b16 %v553
        %v948 = vunpack.c.h.b16 %v553
        %v949 = vunpack.c.l.b16 %v554
        %v950 = vunpack.c.h.b16 %v554
        %v951 = vunpack.c.l.b16 %v555
        %v952 = vunpack.c.h.b16 %v555
        %v953 = vunpack.c.l.b16 %v556
        %v954 = vunpack.c.h.b16 %v556
        %v955 = vpack.c.b16 %v703, %v699
        %v956 = vpack.c.b16 %v704, %v700
        %v957 = vpack.c.b16 %v705, %v701
        %v958 = vpack.c.b16 %v706, %v702
        %v959 = vpack.c.b16 %v711, %v707
        %v960 = vpack.c.b16 %v712, %v708
        %v961 = vpack.c.b16 %v713, %v709
        %v962 = vpack.c.b16 %v714, %v710
        %v963 = vpack.c.b16 %v719, %v715
        %v964 = vpack.c.b16 %v720, %v716
        %v965 = vpack.c.b16 %v721, %v717
        %v966 = vpack.c.b16 %v722, %v718
        %v967 = vpack.c.b16 %v727, %v723
        %v968 = vpack.c.b16 %v728, %v724
        %v969 = vpack.c.b16 %v729, %v725
        %v970 = vpack.c.b16 %v730, %v726
        %v971 = vpack.c.b16 %v735, %v731
        %v972 = vpack.c.b16 %v736, %v732
        %v973 = vpack.c.b16 %v737, %v733
        %v974 = vpack.c.b16 %v738, %v734
        %v975 = vpack.c.b16 %v743, %v739
        %v976 = vpack.c.b16 %v744, %v740
        %v977 = vpack.c.b16 %v745, %v741
        %v978 = vpack.c.b16 %v746, %v742
        %v979 = vpack.c.b16 %v751, %v747
        %v980 = vpack.c.b16 %v752, %v748
        %v981 = vpack.c.b16 %v753, %v749
        %v982 = vpack.c.b16 %v754, %v750
        %v983 = vpack.c.b16 %v759, %v755
        %v984 = vpack.c.b16 %v760, %v756
        %v985 = vpack.c.b16 %v761, %v757
        %v986 = vpack.c.b16 %v762, %v758
        %v987 = vpack.c.b16 %v767, %v763
        %v988 = vpack.c.b16 %v768, %v764
        %v989 = vpack.c.b16 %v769, %v765
        %v990 = vpack.c.b16 %v770, %v766
        %v991 = vpack.c.b16 %v775, %v771
        %v992 = vpack.c.b16 %v776, %v772
        %v993 = vpack.c.b16 %v777, %v773
        %v994 = vpack.c.b16 %v778, %v774
        %v995 = vpack.c.b16 %v783, %v779
        %v996 = vpack.c.b16 %v784, %v780
        %v997 = vpack.c.b16 %v785, %v781
        %v998 = vpack.c.b16 %v786, %v782
        %v999 = vpack.c.b16 %v791, %v787
        %v1000 = vpack.c.b16 %v792, %v788
        %v1001 = vpack.c.b16 %v793, %v789
        %v1002 = vpack.c.b16 %v794, %v790
        %v1003 = vpack.c.b16 %v799, %v795
        %v1004 = vpack.c.b16 %v800, %v796
        %v1005 = vpack.c.b16 %v801, %v797
        %v1006 = vpack.c.b16 %v802, %v798
        %v1007 = vpack.c.b16 %v807, %v803
        %v1008 = vpack.c.b16 %v808, %v804
        %v1009 = vpack.c.b16 %v809, %v805
        %v1010 = vpack.c.b16 %v810, %v806
        %v1011 = vpack.c.b16 %v815, %v811
        %v1012 = vpack.c.b16 %v816, %v812
        %v1013 = vpack.c.b16 %v817, %v813
        %v1014 = vpack.c.b16 %v818, %v814
        %v1015 = vpack.c.b16 %v823, %v819
        %v1016 = vpack.c.b16 %v824, %v820
        %v1017 = vpack.c.b16 %v825, %v821
        %v1018 = vpack.c.b16 %v826, %v822
        %v1019 = vpack.c.b16 %v831, %v827
        %v1020 = vpack.c.b16 %v832, %v828
        %v1021 = vpack.c.b16 %v833, %v829
        %v1022 = vpack.c.b16 %v834, %v830
        %v1023 = vpack.c.b16 %v839, %v835
        %v1024 = vpack.c.b16 %v840, %v836
        %v1025 = vpack.c.b16 %v841, %v837
        %v1026 = vpack.c.b16 %v842, %v838
        %v1027 = vpack.c.b16 %v847, %v843
        %v1028 = vpack.c.b16 %v848, %v844
        %v1029 = vpack.c.b16 %v849, %v845
        %v1030 = vpack.c.b16 %v850, %v846
        %v1031 = vpack.c.b16 %v855, %v851
        %v1032 = vpack.c.b16 %v856, %v852
        %v1033 = vpack.c.b16 %v857, %v853
        %v1034 = vpack.c.b16 %v858, %v854
        %v1035 = vpack.c.b16 %v863, %v859
        %v1036 = vpack.c.b16 %v864, %v860
        %v1037 = vpack.c.b16 %v865, %v861
        %v1038 = vpack.c.b16 %v866, %v862
        %v1039 = vpack.c.b16 %v871, %v867
        %v1040 = vpack.c.b16 %v872, %v868
        %v1041 = vpack.c.b16 %v873, %v869
        %v1042 = vpack.c.b16 %v874, %v870
        %v1043 = vpack.c.b16 %v879, %v875
        %v1044 = vpack.c.b16 %v880, %v876
        %v1045 = vpack.c.b16 %v881, %v877
        %v1046 = vpack.c.b16 %v882, %v878
        %v1047 = vpack.c.b16 %v887, %v883
        %v1048 = vpack.c.b16 %v888, %v884
        %v1049 = vpack.c.b16 %v889, %v885
        %v1050 = vpack.c.b16 %v890, %v886
        %v1051 = vpack.c.b16 %v895, %v891
        %v1052 = vpack.c.b16 %v896, %v892
        %v1053 = vpack.c.b16 %v897, %v893
        %v1054 = vpack.c.b16 %v898, %v894
        %v1055 = vpack.c.b16 %v903, %v899
        %v1056 = vpack.c.b16 %v904, %v900
        %v1057 = vpack.c.b16 %v905, %v901
        %v1058 = vpack.c.b16 %v906, %v902
        %v1059 = vpack.c.b16 %v911, %v907
        %v1060 = vpack.c.b16 %v912, %v908
        %v1061 = vpack.c.b16 %v913, %v909
        %v1062 = vpack.c.b16 %v914, %v910
        %v1063 = vpack.c.b16 %v919, %v915
        %v1064 = vpack.c.b16 %v920, %v916
        %v1065 = vpack.c.b16 %v921, %v917
        %v1066 = vpack.c.b16 %v922, %v918
        %v1067 = vpack.c.b16 %v927, %v923
        %v1068 = vpack.c.b16 %v928, %v924
        %v1069 = vpack.c.b16 %v929, %v925
        %v1070 = vpack.c.b16 %v930, %v926
        %v1071 = vpack.c.b16 %v935, %v931
        %v1072 = vpack.c.b16 %v936, %v932
        %v1073 = vpack.c.b16 %v937, %v933
        %v1074 = vpack.c.b16 %v938, %v934
        %v1075 = vpack.c.b16 %v943, %v939
        %v1076 = vpack.c.b16 %v944, %v940
        %v1077 = vpack.c.b16 %v945, %v941
        %v1078 = vpack.c.b16 %v946, %v942
        %v1079 = vpack.c.b16 %v951, %v947
        %v1080 = vpack.c.b16 %v952, %v948
        %v1081 = vpack.c.b16 %v953, %v949
        %v1082 = vpack.c.b16 %v954, %v950
        %1211 = vmatprep.subr.bf16.mxu0 %v956
        %1212 = vmatpush1.bf16.msra.mxu0 %v955
        %1213 = vmatprep.subr.bf16.mxu0 %v960
        %1214 = vmatpush1.bf16.msra.mxu0 %v959
        %1215 = vmatprep.subr.bf16.mxu0 %v964
        %1216 = vmatpush1.bf16.msra.mxu0 %v963
        %1217 = vmatprep.subr.bf16.mxu0 %v968
        %1218 = vmatpush1.bf16.msra.mxu0 %v967
        %1219 = vmatprep.subr.bf16.mxu0 %v972
        %1220 = vmatpush1.bf16.msra.mxu0 %v971
        %1221 = vmatprep.subr.bf16.mxu0 %v976
        %1222 = vmatpush1.bf16.msra.mxu0 %v975
        %1223 = vmatprep.subr.bf16.mxu0 %v980
        %1224 = vmatpush1.bf16.msra.mxu0 %v979
        %1225 = vmatprep.subr.bf16.mxu0 %v984
        %1226 = vmatpush1.bf16.msra.mxu0 %v983
        %1227 = vmatprep.subr.bf16.mxu0 %v988
        %1228 = vmatpush1.bf16.msra.mxu0 %v987
        %1229 = vmatprep.subr.bf16.mxu0 %v992
        %1230 = vmatpush1.bf16.msra.mxu0 %v991
        %1231 = vmatprep.subr.bf16.mxu0 %v996
        %1232 = vmatpush1.bf16.msra.mxu0 %v995
        %1233 = vmatprep.subr.bf16.mxu0 %v1000
        %1234 = vmatpush1.bf16.msra.mxu0 %v999
        %1235 = vmatprep.subr.bf16.mxu0 %v1004
        %1236 = vmatpush1.bf16.msra.mxu0 %v1003
        %1237 = vmatprep.subr.bf16.mxu0 %v1008
        %1238 = vmatpush1.bf16.msra.mxu0 %v1007
        %1239 = vmatprep.subr.bf16.mxu0 %v1012
        %1240 = vmatpush1.bf16.msra.mxu0 %v1011
        %1241 = vmatprep.subr.bf16.mxu0 %v1016
        %1242 = vmatpush1.bf16.msra.mxu0 %v1015
        %1243 = vmatprep.mubr.bf16.mxu0 %v564
        %1244 = vmatmul.mubr.bf16.gmra.mrb[0].mxu0 %v563
        %v1245 = vpop.f32.mrb[0].mxu0
        %v1246 = vadd.f32 0.0, %v1245
        %v1247 = vpop.f32.mrb[0].mxu0
        %v1248 = vadd.f32 0.0, %v1247
        %v1249 = vpop.f32.mrb[0].mxu0
        %v1250 = vpop.f32.mrb[0].mxu0
        %1251 = vdwg.mxu0
        %1252 = vmatprep.subr.bf16.mxu0 %v1020
        %1253 = vmatpush1.bf16.msra.mxu0 %v1019
        %1254 = vmatprep.subr.bf16.mxu0 %v1024
        %1255 = vmatpush1.bf16.msra.mxu0 %v1023
        %1256 = vmatprep.subr.bf16.mxu0 %v1028
        %1257 = vmatpush1.bf16.msra.mxu0 %v1027
        %1258 = vmatprep.subr.bf16.mxu0 %v1032
        %1259 = vmatpush1.bf16.msra.mxu0 %v1031
        %1260 = vmatprep.subr.bf16.mxu0 %v1036
        %1261 = vmatpush1.bf16.msra.mxu0 %v1035
        %1262 = vmatprep.subr.bf16.mxu0 %v1040
        %1263 = vmatpush1.bf16.msra.mxu0 %v1039
        %1264 = vmatprep.subr.bf16.mxu0 %v1044
        %1265 = vmatpush1.bf16.msra.mxu0 %v1043
        %1266 = vmatprep.subr.bf16.mxu0 %v1048
        %1267 = vmatpush1.bf16.msra.mxu0 %v1047
        %1268 = vmatprep.subr.bf16.mxu0 %v1052
        %1269 = vmatpush1.bf16.msra.mxu0 %v1051
        %1270 = vmatprep.subr.bf16.mxu0 %v1056
        %1271 = vmatpush1.bf16.msra.mxu0 %v1055
        %1272 = vmatprep.subr.bf16.mxu0 %v1060
        %1273 = vmatpush1.bf16.msra.mxu0 %v1059
        %1274 = vmatprep.subr.bf16.mxu0 %v1064
        %1275 = vmatpush1.bf16.msra.mxu0 %v1063
        %1276 = vmatprep.subr.bf16.mxu0 %v1068
        %1277 = vmatpush1.bf16.msra.mxu0 %v1067
        %1278 = vmatprep.subr.bf16.mxu0 %v1072
        %1279 = vmatpush1.bf16.msra.mxu0 %v1071
        %1280 = vmatprep.subr.bf16.mxu0 %v1076
        %1281 = vmatpush1.bf16.msra.mxu0 %v1075
        %1282 = vmatprep.subr.bf16.mxu0 %v1080
        %1283 = vmatpush1.bf16.msra.mxu0 %v1079
        %1284 = vmatprep.mubr.bf16.mxu0 %v566
        %1285 = vmatmul.mubr.bf16.gmra.mrb[0].mxu0 %v565
        %v1286 = vpop.f32.mrb[0].mxu0
        %v1287 = vadd.f32 %v1246, %v1286
        %v1288 = vpop.f32.mrb[0].mxu0
        %v1289 = vadd.f32 %v1248, %v1288
        %v1290 = vpop.f32.mrb[0].mxu0
        %v1291 = vpop.f32.mrb[0].mxu0
        %1292 = vdwg.mxu0
        %1293 = vmatprep.subr.bf16.mxu0 %v958
        %1294 = vmatpush1.bf16.msra.mxu0 %v957
        %1295 = vmatprep.subr.bf16.mxu0 %v962
        %1296 = vmatpush1.bf16.msra.mxu0 %v961
        %1297 = vmatprep.subr.bf16.mxu0 %v966
        %1298 = vmatpush1.bf16.msra.mxu0 %v965
        %1299 = vmatprep.subr.bf16.mxu0 %v970
        %1300 = vmatpush1.bf16.msra.mxu0 %v969
        %1301 = vmatprep.subr.bf16.mxu0 %v974
        %1302 = vmatpush1.bf16.msra.mxu0 %v973
        %1303 = vmatprep.subr.bf16.mxu0 %v978
        %1304 = vmatpush1.bf16.msra.mxu0 %v977
        %1305 = vmatprep.subr.bf16.mxu0 %v982
        %1306 = vmatpush1.bf16.msra.mxu0 %v981
        %1307 = vmatprep.subr.bf16.mxu0 %v986
        %1308 = vmatpush1.bf16.msra.mxu0 %v985
        %1309 = vmatprep.subr.bf16.mxu0 %v990
        %1310 = vmatpush1.bf16.msra.mxu0 %v989
        %1311 = vmatprep.subr.bf16.mxu0 %v994
        %1312 = vmatpush1.bf16.msra.mxu0 %v993
        %1313 = vmatprep.subr.bf16.mxu0 %v998
        %1314 = vmatpush1.bf16.msra.mxu0 %v997
        %1315 = vmatprep.subr.bf16.mxu0 %v1002
        %1316 = vmatpush1.bf16.msra.mxu0 %v1001
        %1317 = vmatprep.subr.bf16.mxu0 %v1006
        %1318 = vmatpush1.bf16.msra.mxu0 %v1005
        %1319 = vmatprep.subr.bf16.mxu0 %v1010
        %1320 = vmatpush1.bf16.msra.mxu0 %v1009
        %1321 = vmatprep.subr.bf16.mxu0 %v1014
        %1322 = vmatpush1.bf16.msra.mxu0 %v1013
        %1323 = vmatprep.subr.bf16.mxu0 %v1018
        %1324 = vmatpush1.bf16.msra.mxu0 %v1017
        %1325 = vmatprep.mubr.bf16.mxu0 %v564
        %1326 = vmatmul.mubr.bf16.gmra.mrb[0].mxu0 %v563
        %v1327 = vpop.f32.mrb[0].mxu0
        %v1328 = vadd.f32 0.0, %v1327
        %v1329 = vpop.f32.mrb[0].mxu0
        %v1330 = vadd.f32 0.0, %v1329
        %v1331 = vpop.f32.mrb[0].mxu0
        %v1332 = vpop.f32.mrb[0].mxu0
        %1333 = vdwg.mxu0
        %1334 = vmatprep.subr.bf16.mxu0 %v1022
        %1335 = vmatpush1.bf16.msra.mxu0 %v1021
        %1336 = vmatprep.subr.bf16.mxu0 %v1026
        %1337 = vmatpush1.bf16.msra.mxu0 %v1025
        %1338 = vmatprep.subr.bf16.mxu0 %v1030
        %1339 = vmatpush1.bf16.msra.mxu0 %v1029
        %1340 = vmatprep.subr.bf16.mxu0 %v1034
        %1341 = vmatpush1.bf16.msra.mxu0 %v1033
        %1342 = vmatprep.subr.bf16.mxu0 %v1038
        %1343 = vmatpush1.bf16.msra.mxu0 %v1037
        %1344 = vmatprep.subr.bf16.mxu0 %v1042
        %1345 = vmatpush1.bf16.msra.mxu0 %v1041
        %1346 = vmatprep.subr.bf16.mxu0 %v1046
        %1347 = vmatpush1.bf16.msra.mxu0 %v1045
        %1348 = vmatprep.subr.bf16.mxu0 %v1050
        %1349 = vmatpush1.bf16.msra.mxu0 %v1049
        %1350 = vmatprep.subr.bf16.mxu0 %v1054
        %1351 = vmatpush1.bf16.msra.mxu0 %v1053
        %1352 = vmatprep.subr.bf16.mxu0 %v1058
        %1353 = vmatpush1.bf16.msra.mxu0 %v1057
        %1354 = vmatprep.subr.bf16.mxu0 %v1062
        %1355 = vmatpush1.bf16.msra.mxu0 %v1061
        %1356 = vmatprep.subr.bf16.mxu0 %v1066
        %1357 = vmatpush1.bf16.msra.mxu0 %v1065
        %1358 = vmatprep.subr.bf16.mxu0 %v1070
        %1359 = vmatpush1.bf16.msra.mxu0 %v1069
        %1360 = vmatprep.subr.bf16.mxu0 %v1074
        %1361 = vmatpush1.bf16.msra.mxu0 %v1073
        %1362 = vmatprep.subr.bf16.mxu0 %v1078
        %1363 = vmatpush1.bf16.msra.mxu0 %v1077
        %1364 = vmatprep.subr.bf16.mxu0 %v1082
        %1365 = vmatpush1.bf16.msra.mxu0 %v1081
        %1366 = vmatprep.mubr.bf16.mxu0 %v566
        %1367 = vmatmul.mubr.bf16.gmra.mrb[0].mxu0 %v565
        %v1368 = vpop.f32.mrb[0].mxu0
        %v1369 = vadd.f32 %v1328, %v1368
        %v1370 = vpop.f32.mrb[0].mxu0
        %v1371 = vadd.f32 %v1330, %v1370
        %v1372 = vpop.f32.mrb[0].mxu0
        %v1373 = vpop.f32.mrb[0].mxu0
        %1374 = vdwg.mxu0
        %v1375 = vadd.f32 %v423, %v1287
        %v1376 = vadd.f32 %v424, %v1289
        %v1377 = vadd.f32 %v425, %v1369
        %v1378 = vadd.f32 %v426, %v1371
        %1379 = vst [vmem:[#allocation2] sm:$0xff] %v1375
        %1380 = vst [vmem:[#allocation2 + $0x8] sm:$0xff] %v1376
        %1381 = vst [vmem:[#allocation2 + $0x10] sm:$0xff] %v1377
        %1382 = vst [vmem:[#allocation2 + $0x18] sm:$0xff] %v1378
        %p1383 = scmp.eq.s32.totalorder %s25, 5
        // Predicated region
        $region81: #{lenet_forward.3} parent=55 // pred_check
          %p1384 = pneg %p1383
        $region82: #{lenet_forward.3} parent=55 // pred_check_branch
          %1386 = sbr.rel (%p1384) target = $region84
        $region83: #{lenet_forward.3} parent=55 // pred_region
          %v1387 = vld [vmem:[#allocation2] sm:$0xff]
          %v1388 = vld [vmem:[#allocation2 + $0x8] sm:$0xff]
          %v1389 = vld [vmem:[#allocation2 + $0x10] sm:$0xff]
          %v1390 = vld [vmem:[#allocation2 + $0x18] sm:$0xff]
          %v1391 = vld [vmem:[#allocation5] sm:$0xf]
          %v1393 = vlaneseq
          %v1394 = vshrl.u32 %v1393, 7
          %v1395 = vsub.s32 0, %v1394
          %v1396 = vrot.slane %v1391, %v1395
          %v1397 = vlaneseq
          %v1398 = vshrl.u32 %v1397, 7
          %v1399 = vsub.s32 1, %v1398
          %v1400 = vrot.slane %v1391, %v1399
          %v1401 = vlaneseq
          %v1402 = vshrl.u32 %v1401, 7
          %v1403 = vsub.s32 2, %v1402
          %v1404 = vrot.slane %v1391, %v1403
          %v1405 = vlaneseq
          %v1406 = vshrl.u32 %v1405, 7
          %v1407 = vsub.s32 3, %v1406
          %v1408 = vrot.slane %v1391, %v1407
          %v1413 = vadd.f32 %v1387, %v1396
          %v1414 = vadd.f32 %v1388, %v1400
          %v1415 = vadd.f32 %v1389, %v1404
          %v1416 = vadd.f32 %v1390, %v1408
          %v1417 = vmax.f32 %v1413, 0.0
          %v1418 = vmax.f32 %v1414, 0.0
          %v1419 = vmax.f32 %v1415, 0.0
          %v1420 = vmax.f32 %v1416, 0.0
          %v1421 = vld [vmem:[%s7] sm:$0xff]
          %v1422 = vld [vmem:[%s7 + $0x8] sm:$0xff]
          %v1423 = vld [vmem:[%s7 + $0x10] sm:$0xff]
          %v1424 = vld [vmem:[%s7 + $0x18] sm:$0xff]
          %v1425 = vmul.f32 %v1417, %v1421
          %v1426 = vmul.f32 %v1418, %v1422
          %v1427 = vmul.f32 %v1419, %v1423
          %v1428 = vmul.f32 %v1420, %v1424
          %v1429 = vpack.c.bf16 %v1425, %v1425
          %v1430 = vpack.c.bf16 %v1426, %v1426
          %v1431 = vpack.c.bf16 %v1427, %v1427
          %v1432 = vpack.c.bf16 %v1428, %v1428
          %v1433 = vld [vmem:[#allocation7] sm:$0xff]
          %v1434 = vld [vmem:[#allocation7 + $0x8] sm:$0xff]
          %v1435 = vld [vmem:[#allocation7 + $0x10] sm:$0xff]
          %v1436 = vld [vmem:[#allocation7 + $0x18] sm:$0xff]
          %v1437 = vld [vmem:[#allocation7 + $0x20] sm:$0xff]
          %v1438 = vld [vmem:[#allocation7 + $0x28] sm:$0xff]
          %v1439 = vld [vmem:[#allocation7 + $0x30] sm:$0xff]
          %v1440 = vld [vmem:[#allocation7 + $0x38] sm:$0xff]
          %v1441 = vld [vmem:[#allocation7 + $0x40] sm:$0xff]
          %v1442 = vld [vmem:[#allocation7 + $0x48] sm:$0xff]
          %v1443 = vld [vmem:[#allocation7 + $0x50] sm:$0xff]
          %v1444 = vld [vmem:[#allocation7 + $0x58] sm:$0xff]
          %v1445 = vld [vmem:[#allocation7 + $0x60] sm:$0xff]
          %v1446 = vld [vmem:[#allocation7 + $0x68] sm:$0xff]
          %v1447 = vld [vmem:[#allocation7 + $0x70] sm:$0xff]
          %v1448 = vld [vmem:[#allocation7 + $0x78] sm:$0xff]
          %v1449 = vld [vmem:[#allocation7 + $0x80] sm:$0xff]
          %v1450 = vld [vmem:[#allocation7 + $0x88] sm:$0xff]
          %v1451 = vld [vmem:[#allocation7 + $0x90] sm:$0xff]
          %v1452 = vld [vmem:[#allocation7 + $0x98] sm:$0xff]
          %v1453 = vld [vmem:[#allocation7 + $0xa0] sm:$0xff]
          %v1454 = vld [vmem:[#allocation7 + $0xa8] sm:$0xff]
          %v1455 = vld [vmem:[#allocation7 + $0xb0] sm:$0xff]
          %v1456 = vld [vmem:[#allocation7 + $0xb8] sm:$0xff]
          %v1457 = vld [vmem:[#allocation7 + $0xc0] sm:$0xff]
          %v1458 = vld [vmem:[#allocation7 + $0xc8] sm:$0xff]
          %v1459 = vld [vmem:[#allocation7 + $0xd0] sm:$0xff]
          %v1460 = vld [vmem:[#allocation7 + $0xd8] sm:$0xff]
          %v1461 = vld [vmem:[#allocation7 + $0xe0] sm:$0xff]
          %v1462 = vld [vmem:[#allocation7 + $0xe8] sm:$0xff]
          %v1463 = vld [vmem:[#allocation7 + $0xf0] sm:$0xff]
          %v1464 = vld [vmem:[#allocation7 + $0xf8] sm:$0xff]
          %v1465 = vld [vmem:[#allocation7 + $0x100] sm:$0xff]
          %v1466 = vld [vmem:[#allocation7 + $0x108] sm:$0xff]
          %v1467 = vld [vmem:[#allocation7 + $0x110] sm:$0xff]
          %v1468 = vld [vmem:[#allocation7 + $0x118] sm:$0xff]
          %v1469 = vld [vmem:[#allocation7 + $0x120] sm:$0xff]
          %v1470 = vld [vmem:[#allocation7 + $0x128] sm:$0xff]
          %v1471 = vld [vmem:[#allocation7 + $0x130] sm:$0xff]
          %v1472 = vld [vmem:[#allocation7 + $0x138] sm:$0xff]
          %v1473 = vld [vmem:[#allocation7 + $0x140] sm:$0xff]
          %v1474 = vld [vmem:[#allocation7 + $0x148] sm:$0xff]
          %v1475 = vld [vmem:[#allocation7 + $0x150] sm:$0xff]
          %v1476 = vld [vmem:[#allocation7 + $0x158] sm:$0xff]
          %v1477 = vld [vmem:[#allocation7 + $0x160] sm:$0xff]
          %v1478 = vld [vmem:[#allocation7 + $0x168] sm:$0xff]
          %v1479 = vld [vmem:[#allocation7 + $0x170] sm:$0xff]
          %v1480 = vld [vmem:[#allocation7 + $0x178] sm:$0xff]
          %v1481 = vld [vmem:[#allocation7 + $0x180] sm:$0xff]
          %v1482 = vld [vmem:[#allocation7 + $0x188] sm:$0xff]
          %v1483 = vld [vmem:[#allocation7 + $0x190] sm:$0xff]
          %v1484 = vld [vmem:[#allocation7 + $0x198] sm:$0xff]
          %v1485 = vld [vmem:[#allocation7 + $0x1a0] sm:$0xff]
          %v1486 = vld [vmem:[#allocation7 + $0x1a8] sm:$0xff]
          %v1487 = vld [vmem:[#allocation7 + $0x1b0] sm:$0xff]
          %v1488 = vld [vmem:[#allocation7 + $0x1b8] sm:$0xff]
          %v1489 = vld [vmem:[#allocation7 + $0x1c0] sm:$0xff]
          %v1490 = vld [vmem:[#allocation7 + $0x1c8] sm:$0xff]
          %v1491 = vld [vmem:[#allocation7 + $0x1d0] sm:$0xff]
          %v1492 = vld [vmem:[#allocation7 + $0x1d8] sm:$0xff]
          %v1493 = vld [vmem:[#allocation7 + $0x1e0] sm:$0xff]
          %v1494 = vld [vmem:[#allocation7 + $0x1e8] sm:$0xff]
          %v1495 = vld [vmem:[#allocation7 + $0x1f0] sm:$0xff]
          %v1496 = vld [vmem:[#allocation7 + $0x1f8] sm:$0xff]
          %v1497 = vld [vmem:[#allocation8] sm:$0x3]
          %v1499 = vlaneseq
          %v1500 = vshrl.u32 %v1499, 7
          %v1501 = vsub.s32 0, %v1500
          %v1502 = vrot.slane %v1497, %v1501
          %v1503 = vlaneseq
          %v1504 = vshrl.u32 %v1503, 7
          %v1505 = vsub.s32 1, %v1504
          %v1506 = vrot.slane %v1497, %v1505
          %v1573 = vunpack.c.l.b16 %v1433
          %v1574 = vunpack.c.h.b16 %v1433
          %v1575 = vunpack.c.l.b16 %v1434
          %v1576 = vunpack.c.h.b16 %v1434
          %v1577 = vunpack.c.l.b16 %v1435
          %v1578 = vunpack.c.h.b16 %v1435
          %v1579 = vunpack.c.l.b16 %v1436
          %v1580 = vunpack.c.h.b16 %v1436
          %v1581 = vunpack.c.l.b16 %v1437
          %v1582 = vunpack.c.h.b16 %v1437
          %v1583 = vunpack.c.l.b16 %v1438
          %v1584 = vunpack.c.h.b16 %v1438
          %v1585 = vunpack.c.l.b16 %v1439
          %v1586 = vunpack.c.h.b16 %v1439
          %v1587 = vunpack.c.l.b16 %v1440
          %v1588 = vunpack.c.h.b16 %v1440
          %v1589 = vunpack.c.l.b16 %v1441
          %v1590 = vunpack.c.h.b16 %v1441
          %v1591 = vunpack.c.l.b16 %v1442
          %v1592 = vunpack.c.h.b16 %v1442
          %v1593 = vunpack.c.l.b16 %v1443
          %v1594 = vunpack.c.h.b16 %v1443
          %v1595 = vunpack.c.l.b16 %v1444
          %v1596 = vunpack.c.h.b16 %v1444
          %v1597 = vunpack.c.l.b16 %v1445
          %v1598 = vunpack.c.h.b16 %v1445
          %v1599 = vunpack.c.l.b16 %v1446
          %v1600 = vunpack.c.h.b16 %v1446
          %v1601 = vunpack.c.l.b16 %v1447
          %v1602 = vunpack.c.h.b16 %v1447
          %v1603 = vunpack.c.l.b16 %v1448
          %v1604 = vunpack.c.h.b16 %v1448
          %v1605 = vunpack.c.l.b16 %v1449
          %v1606 = vunpack.c.h.b16 %v1449
          %v1607 = vunpack.c.l.b16 %v1450
          %v1608 = vunpack.c.h.b16 %v1450
          %v1609 = vunpack.c.l.b16 %v1451
          %v1610 = vunpack.c.h.b16 %v1451
          %v1611 = vunpack.c.l.b16 %v1452
          %v1612 = vunpack.c.h.b16 %v1452
          %v1613 = vunpack.c.l.b16 %v1453
          %v1614 = vunpack.c.h.b16 %v1453
          %v1615 = vunpack.c.l.b16 %v1454
          %v1616 = vunpack.c.h.b16 %v1454
          %v1617 = vunpack.c.l.b16 %v1455
          %v1618 = vunpack.c.h.b16 %v1455
          %v1619 = vunpack.c.l.b16 %v1456
          %v1620 = vunpack.c.h.b16 %v1456
          %v1621 = vunpack.c.l.b16 %v1457
          %v1622 = vunpack.c.h.b16 %v1457
          %v1623 = vunpack.c.l.b16 %v1458
          %v1624 = vunpack.c.h.b16 %v1458
          %v1625 = vunpack.c.l.b16 %v1459
          %v1626 = vunpack.c.h.b16 %v1459
          %v1627 = vunpack.c.l.b16 %v1460
          %v1628 = vunpack.c.h.b16 %v1460
          %v1629 = vunpack.c.l.b16 %v1461
          %v1630 = vunpack.c.h.b16 %v1461
          %v1631 = vunpack.c.l.b16 %v1462
          %v1632 = vunpack.c.h.b16 %v1462
          %v1633 = vunpack.c.l.b16 %v1463
          %v1634 = vunpack.c.h.b16 %v1463
          %v1635 = vunpack.c.l.b16 %v1464
          %v1636 = vunpack.c.h.b16 %v1464
          %v1637 = vunpack.c.l.b16 %v1465
          %v1638 = vunpack.c.h.b16 %v1465
          %v1639 = vunpack.c.l.b16 %v1466
          %v1640 = vunpack.c.h.b16 %v1466
          %v1641 = vunpack.c.l.b16 %v1467
          %v1642 = vunpack.c.h.b16 %v1467
          %v1643 = vunpack.c.l.b16 %v1468
          %v1644 = vunpack.c.h.b16 %v1468
          %v1645 = vunpack.c.l.b16 %v1469
          %v1646 = vunpack.c.h.b16 %v1469
          %v1647 = vunpack.c.l.b16 %v1470
          %v1648 = vunpack.c.h.b16 %v1470
          %v1649 = vunpack.c.l.b16 %v1471
          %v1650 = vunpack.c.h.b16 %v1471
          %v1651 = vunpack.c.l.b16 %v1472
          %v1652 = vunpack.c.h.b16 %v1472
          %v1653 = vunpack.c.l.b16 %v1473
          %v1654 = vunpack.c.h.b16 %v1473
          %v1655 = vunpack.c.l.b16 %v1474
          %v1656 = vunpack.c.h.b16 %v1474
          %v1657 = vunpack.c.l.b16 %v1475
          %v1658 = vunpack.c.h.b16 %v1475
          %v1659 = vunpack.c.l.b16 %v1476
          %v1660 = vunpack.c.h.b16 %v1476
          %v1661 = vunpack.c.l.b16 %v1477
          %v1662 = vunpack.c.h.b16 %v1477
          %v1663 = vunpack.c.l.b16 %v1478
          %v1664 = vunpack.c.h.b16 %v1478
          %v1665 = vunpack.c.l.b16 %v1479
          %v1666 = vunpack.c.h.b16 %v1479
          %v1667 = vunpack.c.l.b16 %v1480
          %v1668 = vunpack.c.h.b16 %v1480
          %v1669 = vunpack.c.l.b16 %v1481
          %v1670 = vunpack.c.h.b16 %v1481
          %v1671 = vunpack.c.l.b16 %v1482
          %v1672 = vunpack.c.h.b16 %v1482
          %v1673 = vunpack.c.l.b16 %v1483
          %v1674 = vunpack.c.h.b16 %v1483
          %v1675 = vunpack.c.l.b16 %v1484
          %v1676 = vunpack.c.h.b16 %v1484
          %v1677 = vunpack.c.l.b16 %v1485
          %v1678 = vunpack.c.h.b16 %v1485
          %v1679 = vunpack.c.l.b16 %v1486
          %v1680 = vunpack.c.h.b16 %v1486
          %v1681 = vunpack.c.l.b16 %v1487
          %v1682 = vunpack.c.h.b16 %v1487
          %v1683 = vunpack.c.l.b16 %v1488
          %v1684 = vunpack.c.h.b16 %v1488
          %v1685 = vunpack.c.l.b16 %v1489
          %v1686 = vunpack.c.h.b16 %v1489
          %v1687 = vunpack.c.l.b16 %v1490
          %v1688 = vunpack.c.h.b16 %v1490
          %v1689 = vunpack.c.l.b16 %v1491
          %v1690 = vunpack.c.h.b16 %v1491
          %v1691 = vunpack.c.l.b16 %v1492
          %v1692 = vunpack.c.h.b16 %v1492
          %v1693 = vunpack.c.l.b16 %v1493
          %v1694 = vunpack.c.h.b16 %v1493
          %v1695 = vunpack.c.l.b16 %v1494
          %v1696 = vunpack.c.h.b16 %v1494
          %v1697 = vunpack.c.l.b16 %v1495
          %v1698 = vunpack.c.h.b16 %v1495
          %v1699 = vunpack.c.l.b16 %v1496
          %v1700 = vunpack.c.h.b16 %v1496
          %v1701 = vpack.c.b16 %v1575, %v1573
          %v1702 = vpack.c.b16 %v1576, %v1574
          %v1703 = vpack.c.b16 %v1579, %v1577
          %v1704 = vpack.c.b16 %v1580, %v1578
          %v1705 = vpack.c.b16 %v1583, %v1581
          %v1706 = vpack.c.b16 %v1584, %v1582
          %v1707 = vpack.c.b16 %v1587, %v1585
          %v1708 = vpack.c.b16 %v1588, %v1586
          %v1709 = vpack.c.b16 %v1591, %v1589
          %v1710 = vpack.c.b16 %v1592, %v1590
          %v1711 = vpack.c.b16 %v1595, %v1593
          %v1712 = vpack.c.b16 %v1596, %v1594
          %v1713 = vpack.c.b16 %v1599, %v1597
          %v1714 = vpack.c.b16 %v1600, %v1598
          %v1715 = vpack.c.b16 %v1603, %v1601
          %v1716 = vpack.c.b16 %v1604, %v1602
          %v1717 = vpack.c.b16 %v1607, %v1605
          %v1718 = vpack.c.b16 %v1608, %v1606
          %v1719 = vpack.c.b16 %v1611, %v1609
          %v1720 = vpack.c.b16 %v1612, %v1610
          %v1721 = vpack.c.b16 %v1615, %v1613
          %v1722 = vpack.c.b16 %v1616, %v1614
          %v1723 = vpack.c.b16 %v1619, %v1617
          %v1724 = vpack.c.b16 %v1620, %v1618
          %v1725 = vpack.c.b16 %v1623, %v1621
          %v1726 = vpack.c.b16 %v1624, %v1622
          %v1727 = vpack.c.b16 %v1627, %v1625
          %v1728 = vpack.c.b16 %v1628, %v1626
          %v1729 = vpack.c.b16 %v1631, %v1629
          %v1730 = vpack.c.b16 %v1632, %v1630
          %v1731 = vpack.c.b16 %v1635, %v1633
          %v1732 = vpack.c.b16 %v1636, %v1634
          %v1733 = vpack.c.b16 %v1639, %v1637
          %v1734 = vpack.c.b16 %v1640, %v1638
          %v1735 = vpack.c.b16 %v1643, %v1641
          %v1736 = vpack.c.b16 %v1644, %v1642
          %v1737 = vpack.c.b16 %v1647, %v1645
          %v1738 = vpack.c.b16 %v1648, %v1646
          %v1739 = vpack.c.b16 %v1651, %v1649
          %v1740 = vpack.c.b16 %v1652, %v1650
          %v1741 = vpack.c.b16 %v1655, %v1653
          %v1742 = vpack.c.b16 %v1656, %v1654
          %v1743 = vpack.c.b16 %v1659, %v1657
          %v1744 = vpack.c.b16 %v1660, %v1658
          %v1745 = vpack.c.b16 %v1663, %v1661
          %v1746 = vpack.c.b16 %v1664, %v1662
          %v1747 = vpack.c.b16 %v1667, %v1665
          %v1748 = vpack.c.b16 %v1668, %v1666
          %v1749 = vpack.c.b16 %v1671, %v1669
          %v1750 = vpack.c.b16 %v1672, %v1670
          %v1751 = vpack.c.b16 %v1675, %v1673
          %v1752 = vpack.c.b16 %v1676, %v1674
          %v1753 = vpack.c.b16 %v1679, %v1677
          %v1754 = vpack.c.b16 %v1680, %v1678
          %v1755 = vpack.c.b16 %v1683, %v1681
          %v1756 = vpack.c.b16 %v1684, %v1682
          %v1757 = vpack.c.b16 %v1687, %v1685
          %v1758 = vpack.c.b16 %v1688, %v1686
          %v1759 = vpack.c.b16 %v1691, %v1689
          %v1760 = vpack.c.b16 %v1692, %v1690
          %v1761 = vpack.c.b16 %v1695, %v1693
          %v1762 = vpack.c.b16 %v1696, %v1694
          %v1763 = vpack.c.b16 %v1699, %v1697
          %v1764 = vpack.c.b16 %v1700, %v1698
          %1829 = vmatprep.subr.bf16.mxu0 %v1702
          %1830 = vmatpush1.bf16.msra.mxu0 %v1701
          %1831 = vmatprep.subr.bf16.mxu0 %v1704
          %1832 = vmatpush1.bf16.msra.mxu0 %v1703
          %1833 = vmatprep.subr.bf16.mxu0 %v1706
          %1834 = vmatpush1.bf16.msra.mxu0 %v1705
          %1835 = vmatprep.subr.bf16.mxu0 %v1708
          %1836 = vmatpush1.bf16.msra.mxu0 %v1707
          %1837 = vmatprep.subr.bf16.mxu0 %v1710
          %1838 = vmatpush1.bf16.msra.mxu0 %v1709
          %1839 = vmatprep.subr.bf16.mxu0 %v1712
          %1840 = vmatpush1.bf16.msra.mxu0 %v1711
          %1841 = vmatprep.subr.bf16.mxu0 %v1714
          %1842 = vmatpush1.bf16.msra.mxu0 %v1713
          %1843 = vmatprep.subr.bf16.mxu0 %v1716
          %1844 = vmatpush1.bf16.msra.mxu0 %v1715
          %1845 = vmatprep.subr.bf16.mxu0 %v1718
          %1846 = vmatpush1.bf16.msra.mxu0 %v1717
          %1847 = vmatprep.subr.bf16.mxu0 %v1720
          %1848 = vmatpush1.bf16.msra.mxu0 %v1719
          %1849 = vmatprep.subr.bf16.mxu0 %v1722
          %1850 = vmatpush1.bf16.msra.mxu0 %v1721
          %1851 = vmatprep.subr.bf16.mxu0 %v1724
          %1852 = vmatpush1.bf16.msra.mxu0 %v1723
          %1853 = vmatprep.subr.bf16.mxu0 %v1726
          %1854 = vmatpush1.bf16.msra.mxu0 %v1725
          %1855 = vmatprep.subr.bf16.mxu0 %v1728
          %1856 = vmatpush1.bf16.msra.mxu0 %v1727
          %1857 = vmatprep.subr.bf16.mxu0 %v1730
          %1858 = vmatpush1.bf16.msra.mxu0 %v1729
          %1859 = vmatprep.subr.bf16.mxu0 %v1732
          %1860 = vmatpush1.bf16.msra.mxu0 %v1731
          %1861 = vmatprep.mubr.bf16.mxu0 %v1430
          %1862 = vmatmul.mubr.bf16.gmra.mrb[0].mxu0 %v1429
          %v1863 = vpop.f32.mrb[0].mxu0
          %v1864 = vadd.f32 %v1502, %v1863
          %v1865 = vpop.f32.mrb[0].mxu0
          %v1866 = vadd.f32 %v1506, %v1865
          %v1867 = vpop.f32.mrb[0].mxu0
          %v1868 = vpop.f32.mrb[0].mxu0
          %1869 = vdwg.mxu0
          %1870 = vmatprep.subr.bf16.mxu0 %v1734
          %1871 = vmatpush1.bf16.msra.mxu0 %v1733
          %1872 = vmatprep.subr.bf16.mxu0 %v1736
          %1873 = vmatpush1.bf16.msra.mxu0 %v1735
          %1874 = vmatprep.subr.bf16.mxu0 %v1738
          %1875 = vmatpush1.bf16.msra.mxu0 %v1737
          %1876 = vmatprep.subr.bf16.mxu0 %v1740
          %1877 = vmatpush1.bf16.msra.mxu0 %v1739
          %1878 = vmatprep.subr.bf16.mxu0 %v1742
          %1879 = vmatpush1.bf16.msra.mxu0 %v1741
          %1880 = vmatprep.subr.bf16.mxu0 %v1744
          %1881 = vmatpush1.bf16.msra.mxu0 %v1743
          %1882 = vmatprep.subr.bf16.mxu0 %v1746
          %1883 = vmatpush1.bf16.msra.mxu0 %v1745
          %1884 = vmatprep.subr.bf16.mxu0 %v1748
          %1885 = vmatpush1.bf16.msra.mxu0 %v1747
          %1886 = vmatprep.subr.bf16.mxu0 %v1750
          %1887 = vmatpush1.bf16.msra.mxu0 %v1749
          %1888 = vmatprep.subr.bf16.mxu0 %v1752
          %1889 = vmatpush1.bf16.msra.mxu0 %v1751
          %1890 = vmatprep.subr.bf16.mxu0 %v1754
          %1891 = vmatpush1.bf16.msra.mxu0 %v1753
          %1892 = vmatprep.subr.bf16.mxu0 %v1756
          %1893 = vmatpush1.bf16.msra.mxu0 %v1755
          %1894 = vmatprep.subr.bf16.mxu0 %v1758
          %1895 = vmatpush1.bf16.msra.mxu0 %v1757
          %1896 = vmatprep.subr.bf16.mxu0 %v1760
          %1897 = vmatpush1.bf16.msra.mxu0 %v1759
          %1898 = vmatprep.subr.bf16.mxu0 %v1762
          %1899 = vmatpush1.bf16.msra.mxu0 %v1761
          %1900 = vmatprep.subr.bf16.mxu0 %v1764
          %1901 = vmatpush1.bf16.msra.mxu0 %v1763
          %1902 = vmatprep.mubr.bf16.mxu0 %v1432
          %1903 = vmatmul.mubr.bf16.gmra.mrb[0].mxu0 %v1431
          %v1904 = vpop.f32.mrb[0].mxu0
          %v1905 = vadd.f32 %v1864, %v1904
          %v1906 = vpop.f32.mrb[0].mxu0
          %v1907 = vadd.f32 %v1866, %v1906
          %v1908 = vpop.f32.mrb[0].mxu0
          %v1909 = vpop.f32.mrb[0].mxu0
          %1910 = vdwg.mxu0
          %v1911 = vmax.f32 %v1905, 0.0
          %v1912 = vmax.f32 %v1907, 0.0
          %v1913 = vld [vmem:[%s8] sm:$0xff]
          %v1914 = vld [vmem:[%s8 + $0x8] sm:$0xff]
          %v1915 = vmul.f32 %v1911, %v1913
          %v1916 = vmul.f32 %v1912, %v1914
          %v1917 = vpack.c.bf16 %v1915, %v1915
          %v1918 = vpack.c.bf16 %v1916, %v1916
          %v1919 = vld [vmem:[%s5] sm:$0xf]
          %v1920 = vld [vmem:[%s5 + $0x4] sm:$0xf]
          %v1921 = vld [vmem:[%s5 + $0x8] sm:$0xf]
          %v1922 = vld [vmem:[%s5 + $0xc] sm:$0xf]
          %v1923 = vld [vmem:[%s5 + $0x10] sm:$0xf]
          %v1924 = vld [vmem:[%s5 + $0x14] sm:$0xf]
          %v1925 = vld [vmem:[%s5 + $0x18] sm:$0xf]
          %v1926 = vld [vmem:[%s5 + $0x1c] sm:$0xf]
          %v1927 = vld [vmem:[%s5 + $0x20] sm:$0xf]
          %v1928 = vld [vmem:[%s5 + $0x24] sm:$0xf]
          %v1929 = vld [vmem:[%s5 + $0x28] sm:$0xf]
          %v1930 = vld [vmem:[%s5 + $0x2c] sm:$0xf]
          %v1931 = vld [vmem:[%s5 + $0x30] sm:$0xf]
          %v1932 = vld [vmem:[%s5 + $0x34] sm:$0xf]
          %v1933 = vld [vmem:[%s5 + $0x38] sm:$0xf]
          %v1934 = vld [vmem:[%s5 + $0x3c] sm:$0xf]
          %v1935 = vld [vmem:[%s5 + $0x40] sm:$0xf]
          %v1936 = vld [vmem:[%s5 + $0x44] sm:$0xf]
          %v1937 = vld [vmem:[%s5 + $0x48] sm:$0xf]
          %v1938 = vld [vmem:[%s5 + $0x4c] sm:$0xf]
          %v1939 = vld [vmem:[%s5 + $0x50] sm:$0xf]
          %v1940 = vld [vmem:[%s5 + $0x54] sm:$0xf]
          %v1941 = vld [vmem:[%s5 + $0x58] sm:$0xf]
          %v1942 = vld [vmem:[%s5 + $0x5c] sm:$0xf]
          %v1943 = vld [vmem:[%s5 + $0x60] sm:$0xf]
          %v1944 = vld [vmem:[%s5 + $0x64] sm:$0xf]
          %v1945 = vld [vmem:[%s5 + $0x68] sm:$0xf]
          %v1946 = vld [vmem:[%s5 + $0x6c] sm:$0xf]
          %v1947 = vld [vmem:[%s5 + $0x70] sm:$0xf]
          %v1948 = vld [vmem:[%s5 + $0x74] sm:$0xf]
          %v1949 = vld [vmem:[%s5 + $0x78] sm:$0xf]
          %v1950 = vld [vmem:[%s5 + $0x7c] sm:$0xf]
          %v1951 = vld [vmem:[#allocation10] sm:$0x1]
          %v1953 = vlaneseq
          %v1954 = vshrl.u32 %v1953, 7
          %v1955 = vsub.s32 0, %v1954
          %v1956 = vrot.slane %v1951, %v1955
          %v1990 = vunpack.c.l.b16 %v1919
          %v1991 = vunpack.c.l.b16 %v1920
          %v1992 = vunpack.c.l.b16 %v1921
          %v1993 = vunpack.c.l.b16 %v1922
          %v1994 = vunpack.c.l.b16 %v1923
          %v1995 = vunpack.c.l.b16 %v1924
          %v1996 = vunpack.c.l.b16 %v1925
          %v1997 = vunpack.c.l.b16 %v1926
          %v1998 = vunpack.c.l.b16 %v1927
          %v1999 = vunpack.c.l.b16 %v1928
          %v2000 = vunpack.c.l.b16 %v1929
          %v2001 = vunpack.c.l.b16 %v1930
          %v2002 = vunpack.c.l.b16 %v1931
          %v2003 = vunpack.c.l.b16 %v1932
          %v2004 = vunpack.c.l.b16 %v1933
          %v2005 = vunpack.c.l.b16 %v1934
          %v2006 = vunpack.c.l.b16 %v1935
          %v2007 = vunpack.c.l.b16 %v1936
          %v2008 = vunpack.c.l.b16 %v1937
          %v2009 = vunpack.c.l.b16 %v1938
          %v2010 = vunpack.c.l.b16 %v1939
          %v2011 = vunpack.c.l.b16 %v1940
          %v2012 = vunpack.c.l.b16 %v1941
          %v2013 = vunpack.c.l.b16 %v1942
          %v2014 = vunpack.c.l.b16 %v1943
          %v2015 = vunpack.c.l.b16 %v1944
          %v2016 = vunpack.c.l.b16 %v1945
          %v2017 = vunpack.c.l.b16 %v1946
          %v2018 = vunpack.c.l.b16 %v1947
          %v2019 = vunpack.c.l.b16 %v1948
          %v2020 = vunpack.c.l.b16 %v1949
          %v2021 = vunpack.c.l.b16 %v1950
          %v2022 = vpack.c.b16 %v1991, %v1990
          %v2023 = vpack.c.b16 %v1993, %v1992
          %v2024 = vpack.c.b16 %v1995, %v1994
          %v2025 = vpack.c.b16 %v1997, %v1996
          %v2026 = vpack.c.b16 %v1999, %v1998
          %v2027 = vpack.c.b16 %v2001, %v2000
          %v2028 = vpack.c.b16 %v2003, %v2002
          %v2029 = vpack.c.b16 %v2005, %v2004
          %v2030 = vpack.c.b16 %v2007, %v2006
          %v2031 = vpack.c.b16 %v2009, %v2008
          %v2032 = vpack.c.b16 %v2011, %v2010
          %v2033 = vpack.c.b16 %v2013, %v2012
          %v2034 = vpack.c.b16 %v2015, %v2014
          %v2035 = vpack.c.b16 %v2017, %v2016
          %v2036 = vpack.c.b16 %v2019, %v2018
          %v2037 = vpack.c.b16 %v2021, %v2020
          %2054 = vmatprep.subr.bf16.mxu0 0
          %2055 = vmatpush1.bf16.msra.mxu0 %v2022
          %2056 = vmatprep.subr.bf16.mxu0 0
          %2057 = vmatpush1.bf16.msra.mxu0 %v2023
          %2058 = vmatprep.subr.bf16.mxu0 0
          %2059 = vmatpush1.bf16.msra.mxu0 %v2024
          %2060 = vmatprep.subr.bf16.mxu0 0
          %2061 = vmatpush1.bf16.msra.mxu0 %v2025
          %2062 = vmatprep.subr.bf16.mxu0 0
          %2063 = vmatpush1.bf16.msra.mxu0 %v2026
          %2064 = vmatprep.subr.bf16.mxu0 0
          %2065 = vmatpush1.bf16.msra.mxu0 %v2027
          %2066 = vmatprep.subr.bf16.mxu0 0
          %2067 = vmatpush1.bf16.msra.mxu0 %v2028
          %2068 = vmatprep.subr.bf16.mxu0 0
          %2069 = vmatpush1.bf16.msra.mxu0 %v2029
          %2070 = vmatprep.subr.bf16.mxu0 0
          %2071 = vmatpush1.bf16.msra.mxu0 %v2030
          %2072 = vmatprep.subr.bf16.mxu0 0
          %2073 = vmatpush1.bf16.msra.mxu0 %v2031
          %2074 = vmatprep.subr.bf16.mxu0 0
          %2075 = vmatpush1.bf16.msra.mxu0 %v2032
          %2076 = vmatprep.subr.bf16.mxu0 0
          %2077 = vmatpush1.bf16.msra.mxu0 %v2033
          %2078 = vmatprep.subr.bf16.mxu0 0
          %2079 = vmatpush1.bf16.msra.mxu0 %v2034
          %2080 = vmatprep.subr.bf16.mxu0 0
          %2081 = vmatpush1.bf16.msra.mxu0 %v2035
          %2082 = vmatprep.subr.bf16.mxu0 0
          %2083 = vmatpush1.bf16.msra.mxu0 %v2036
          %2084 = vmatprep.subr.bf16.mxu0 0
          %2085 = vmatpush1.bf16.msra.mxu0 %v2037
          %2086 = vmatprep.mubr.bf16.mxu0 %v1918
          %2087 = vmatmul.mubr.bf16.gmra.mrb[0].mxu0 %v1917
          %v2088 = vpop.f32.mrb[0].mxu0
          %v2089 = vadd.f32 %v1956, %v2088
          %v2090 = vpop.f32.mrb[0].mxu0
          %v2091 = vpop.f32.mrb[0].mxu0
          %v2092 = vpop.f32.mrb[0].mxu0
          %2093 = vdwg.mxu0
          %vm2094 = vcmask 80896
          %v2095 = vsel %vm2094, %v2089, -inf
          %2096 = vmax.xlane.f32.xlu0 %v2095
          %v2097 = vpop.xlane.xlu0 %2096
          %v2098 = vsub.f32 %v2089, %v2097
          %v2099 = vmul.f32 %v2098, 1.442695
          %v2100 = vpow.pop %v2099
          %v2101 = vsel %vm2094, %v2100, 0.0
          %2102 = vadd.xlane.f32.xlu0 %v2101
          %v2103 = vpop.xlane.xlu0 %2102
          %v2104 = vrcp.pop %v2103
          %v2105 = vmul.f32 %v2100, %v2104
          %2106 = vst.msk [vmem:[%s9] sm:$0xff] %vm2094, %v2105
        $region84: #{lenet_forward.3} parent=55 // pred_fallthru
          _
        // Predicated region
        $region85: #{lenet_forward.3} parent=55 // pred_check
          %p2107 = pneg %p237
        $region86: #{lenet_forward.3} parent=55 // pred_check_branch
          %2109 = sbr.rel (%p2107) target = $region88
        $region87: #{lenet_forward.3} parent=55 // pred_region
          _
        $region88: #{lenet_forward.3} parent=55 // pred_fallthru
          _
        // Predicated region
        $region89: #{lenet_forward.3} parent=55 // pred_check
          %p2110 = pneg %p237
        $region90: #{lenet_forward.3} parent=55 // pred_check_branch
          %2112 = sbr.rel (%p2110) target = $region92
        $region91: #{lenet_forward.3} parent=55 // pred_region
          _
        $region92: #{lenet_forward.3} parent=55 // pred_fallthru
          _
      $region56: #{lenet_forward.3} parent=5 // pred_fallthru
        _
      %p2113 = scmp.le.s32.totalorder 2, %s20
      // Predicated region
      $region93: #{lenet_forward.3} parent=5 // pred_check
        %p2114 = pneg %p2113
      $region94: #{lenet_forward.3} parent=5 // pred_check_branch
        %2116 = sbr.rel (%p2114) target = $region96
      $region95: #{lenet_forward.3} parent=5 // pred_region
        %s2117 = ssub.s32 %s20, 2
      $region96: #{lenet_forward.3} parent=5 // pred_fallthru
        _
    $region6: #{lenet_forward.3} parent=1 // loop_footer
      %s24 = sadd.s32 1, %s20
    $region7: #{lenet_forward.3} parent=1 // loop_footer_branch
      %19 = sbr.rel target = $region3
    $region8: #{lenet_forward.3} parent=1 // loop_exit
      _
    %2118 = vsyncpa [#allocation4], 1
    %s2119 = scalar_lea.sflag [#allocation4], 1
    %2120 = vsyncpa %s2119, 1
    %2121 = vsyncpa [#allocation6], 1
    %2122 = vsyncpa [#allocation9], 1

</llo_original>
